<compile_context>
chip_gen: v7x
topology: tpu7x:2x2x1
jax: 0.10.0
libtpu: 0.0.40
codegen_flags: <defaults>
</compile_context>

<pallas_src>
import functools
import math

import jax
import jax.numpy as jnp
from jax import lax
from jax.experimental import pallas as pl
from jax.experimental.pallas import tpu as pltpu

_VMEM_LIMIT_BYTES = 32 * 1024 * 1024  # fits default/physical VMEM on v5e/v6e/v7x


def _round_up(n: int, m: int) -> int:
    return ((n + m - 1) // m) * m


def _row_multiple(dtype) -> int:
    itemsize = jnp.dtype(dtype).itemsize
    if itemsize >= 4:
        return 8
    if itemsize == 2:
        return 16
    return 32


def _resident_spec(shape):
    """BlockSpec for a grid-constant operand (weight / bias).

    Constant index_map -> DMA'd once; Buffered(1) disables double-buffering so
    resident weights only cost 1x their size in VMEM.
    """
    nd = len(shape)
    return pl.BlockSpec(shape, lambda *_: (0,) * nd, pipeline_mode=pl.Buffered(1))


# ----------------------------------------------------------------------------
# Projection kernel: y = x @ W^T + b   (LoRA is pre-merged into W^T outside)
# ----------------------------------------------------------------------------
def _linear_kernel(x_ref, wt_ref, b_ref, o_ref):
    # Native-dtype operands straight into the MXU; accumulate in f32.
    acc = jnp.dot(x_ref[...], wt_ref[...], preferred_element_type=jnp.float32)
    acc = acc + b_ref[...].astype(jnp.float32)
    o_ref[...] = acc.astype(o_ref.dtype)


def _pallas_linear(x2, w_t, b, *, tm=256):
    """x2: [N, d_in] -> [N, d_out]; w_t pre-transposed to (d_in, d_out)."""
    N, d_in = x2.shape
    d_out = w_t.shape[1]

    # dtype-aware row tile: multiples of 128 when N is large, packed-row
    # multiples (8 f32 / 16 bf16 / 32 int8) for small ragged N.
    mult = _row_multiple(x2.dtype)
    if N >= 128:
        tm_eff = min(_round_up(tm, 128), _round_up(N, 128))
    else:
        tm_eff = _round_up(N, mult)
    n_pad = _round_up(N, tm_eff)
    if n_pad != N:
        x2 = jnp.pad(x2, ((0, n_pad - N), (0, 0)))

    b2 = b.reshape(1, d_out)
    x_spec = pl.BlockSpec((tm_eff, d_in), lambda i: (i, 0))
    o_spec = pl.BlockSpec((tm_eff, d_out), lambda i: (i, 0))

    out = pl.pallas_call(
        _linear_kernel,
        out_shape=jax.ShapeDtypeStruct((n_pad, d_out), x2.dtype),
        grid_spec=pltpu.PrefetchScalarGridSpec(
            num_scalar_prefetch=0,
            grid=(n_pad // tm_eff,),
            in_specs=[x_spec,
                      _resident_spec((d_in, d_out)),
                      _resident_spec((1, d_out))],
            out_specs=o_spec,
        ),
        compiler_params=pltpu.CompilerParams(
            dimension_semantics=("parallel",),   # row axis shards across TCs
            vmem_limit_bytes=_VMEM_LIMIT_BYTES),
    )(x2, w_t, b2)
    return out[:N] if n_pad != N else out


# ----------------------------------------------------------------------------
# Fused SDPA + out_proj: grid = (batch, kv_tiles); flash-style online softmax
# over the key axis, head split done with static lane slices in-kernel, and
# the output projection applied in the finalize step (lane-dense [Nq,E] store).
# ----------------------------------------------------------------------------
def _sdpa_outproj_kernel(q_ref, k_ref, v_ref, wot_ref, bo_ref, o_ref,
                         m_sc, l_sc, acc_sc, *, num_heads, scale, nk_valid, tk):
    j = pl.program_id(1)

    @pl.when(j == 0)
    def _():
        m_sc[...] = jnp.full_like(m_sc, -jnp.inf)
        l_sc[...] = jnp.zeros_like(l_sc)
        acc_sc[...] = jnp.zeros_like(acc_sc)

    q = q_ref[0]                          # [Nq, D]   (D = num_heads * c)
    k = k_ref[0]                          # [tk, D]
    v = v_ref[0]                          # [tk, D]
    nq, D = q.shape
    c = D // num_heads

    # Key-padding mask (static no-op when Nk is already a multiple of tk).
    masking = (nk_valid % tk) != 0
    if masking:
        col = j * tk + lax.broadcasted_iota(jnp.int32, (nq, tk), 1)

    for h in range(num_heads):
        sl = slice(h * c, (h + 1) * c)
        # q_h @ k_h^T: contract the head dim directly (no explicit transpose).
        s = lax.dot_general(q[:, sl], k[:, sl], (((1,), (1,)), ((), ())),
                            preferred_element_type=jnp.float32) * scale   # [Nq, tk]
        if masking:
            s = jnp.where(col < nk_valid, s, -jnp.inf)
        m_prev = m_sc[h]                                                   # [Nq, 1]
        m_new = jnp.maximum(m_prev, jnp.max(s, axis=-1, keepdims=True))
        alpha = jnp.exp(m_prev - m_new)
        p = jnp.exp(s - m_new)                                             # [Nq, tk]
        l_sc[h] = alpha * l_sc[h] + jnp.sum(p, axis=-1, keepdims=True)
        acc_sc[:, sl] = alpha * acc_sc[:, sl] + jnp.dot(
            p.astype(v.dtype), v[:, sl], preferred_element_type=jnp.float32)
        m_sc[h] = m_new

    @pl.when(j == pl.num_programs(1) - 1)
    def _():
        # Per-head normalization on the EUP (approx reciprocal), then one
        # full-K, lane-dense fused out_proj matmul and a single [Nq, E] store.
        for h in range(num_heads):
            sl = slice(h * c, (h + 1) * c)
            inv = pl.reciprocal(l_sc[h], approx=True)
            acc_sc[:, sl] = acc_sc[:, sl] * inv
        o = jnp.dot(acc_sc[...].astype(wot_ref.dtype), wot_ref[...],
                    preferred_element_type=jnp.float32)
        o = o + bo_ref[...].astype(jnp.float32)
        o_ref[0] = o.astype(o_ref.dtype)
    # TODO(synk): training-time attention dropout (dropout_p > 0) not
    # implemented; the module's eval path (p = 0) is what this reproduces.
    # TODO(synk): very large Nq could additionally tile the query axis.


def _pallas_sdpa_outproj(qp, kp, vp, wo_t, bo, *, num_heads, tk=512):
    """qp: [B, Nq, D], kp/vp: [B, Nk, D], wo_t: [D, E] -> [B, Nq, E]."""
    B, Nq, D = qp.shape
    Nk = kp.shape[1]
    E = wo_t.shape[1]
    c = D // num_heads

    tk_eff = min(_round_up(tk, 128), _round_up(Nk, 128))
    nk_pad = _round_up(Nk, tk_eff)
    if nk_pad != Nk:
        kp = jnp.pad(kp, ((0, 0), (0, nk_pad - Nk), (0, 0)))
        vp = jnp.pad(vp, ((0, 0), (0, nk_pad - Nk), (0, 0)))
    n_kv = nk_pad // tk_eff

    bo2 = bo.reshape(1, E)
    kernel = functools.partial(_sdpa_outproj_kernel, num_heads=num_heads,
                               scale=1.0 / math.sqrt(c), nk_valid=Nk, tk=tk_eff)

    return pl.pallas_call(
        kernel,
        out_shape=jax.ShapeDtypeStruct((B, Nq, E), qp.dtype),
        grid_spec=pltpu.PrefetchScalarGridSpec(
            num_scalar_prefetch=0,
            grid=(B, n_kv),
            in_specs=[
                pl.BlockSpec((1, Nq, D), lambda b, j: (b, 0, 0)),     # q (resident per b)
                pl.BlockSpec((1, tk_eff, D), lambda b, j: (b, j, 0)),  # k tile
                pl.BlockSpec((1, tk_eff, D), lambda b, j: (b, j, 0)),  # v tile
                _resident_spec((D, E)),                                # wo^T
                _resident_spec((1, E)),                                # bo
            ],
            out_specs=pl.BlockSpec((1, Nq, E), lambda b, j: (b, 0, 0)),
            scratch_shapes=[
                pltpu.VMEM((num_heads, Nq, 1), jnp.float32),   # m (running max)
                pltpu.VMEM((num_heads, Nq, 1), jnp.float32),   # l (running sum)
                pltpu.VMEM((Nq, D), jnp.float32),              # acc (head-merged)
            ],
        ),
        compiler_params=pltpu.CompilerParams(
            dimension_semantics=("parallel", "arbitrary"),
            vmem_limit_bytes=_VMEM_LIMIT_BYTES),
    )(qp, kp, vp, wo_t, bo2)


# ----------------------------------------------------------------------------
# Full Attention_LoRA forward.
# ----------------------------------------------------------------------------
@functools.partial(jax.jit, static_argnames=("num_heads", "tm", "tk"))
def attention_lora_forward(q, k, v, params, *, num_heads, tm=256, tk=512):
    B, Nq, _ = q.shape
    Nk = k.shape[1]
    internal_dim = params["wq_t"].shape[1]

    # Eval-path LoRA merge: W_eff^T = W^T + A^T @ B^T (one tiny matmul each),
    # so the projection kernel only sees a single dense weight.
    wq_eff_t = params["wq_t"] + params["aq_t"] @ params["bq_lora_t"]
    wv_eff_t = params["wv_t"] + params["av_t"] @ params["bv_lora_t"]

    qp = _pallas_linear(q.reshape(B * Nq, -1), wq_eff_t, params["bq"], tm=tm)
    kp = _pallas_linear(k.reshape(B * Nk, -1), params["wk_t"], params["bk"], tm=tm)
    vp = _pallas_linear(v.reshape(B * Nk, -1), wv_eff_t, params["bv"], tm=tm)

    # Keep [B, N, H*c] layout (free reshape, no transpose); head split happens
    # inside the attention kernel, out_proj is fused into its epilogue.
    out = _pallas_sdpa_outproj(qp.reshape(B, Nq, internal_dim),
                               kp.reshape(B, Nk, internal_dim),
                               vp.reshape(B, Nk, internal_dim),
                               params["wo_t"], params["bo"],
                               num_heads=num_heads, tk=tk)
    return out


if __name__ == "__main__":
    # Small deterministic shapes consistent with the module:
    #   embedding_dim=32, kv_in_dim=32, internal_dim=16, num_heads=2 (head dim 8),
    #   LoRA rank r=4, batch=2, 8 query tokens, 12 key/value tokens.
    B, Nq, Nk = 2, 8, 12
    E, KV_IN, INTERNAL, H, R = 32, 32, 16, 2, 4

    key = jax.random.PRNGKey(0)
    ks = jax.random.split(key, 15)
    q = jax.random.normal(ks[0], (B, Nq, E), jnp.float32)
    k = jax.random.normal(ks[1], (B, Nk, KV_IN), jnp.float32)
    v = jax.random.normal(ks[2], (B, Nk, KV_IN), jnp.float32)

    def lin_w(kk, out_d, in_d):
        return jax.random.normal(kk, (out_d, in_d), jnp.float32) * 0.05

    def lin_b(kk, out_d):
        return jax.random.normal(kk, (out_d,), jnp.float32) * 0.05

    # PyTorch Linear layout: weight [out, in], bias [out].
    wq, bq = lin_w(ks[3], INTERNAL, E), lin_b(ks[4], INTERNAL)      # q_proj
    wk, bk = lin_w(ks[5], INTERNAL, KV_IN), lin_b(ks[6], INTERNAL)  # k_proj
    wv, bv = lin_w(ks[7], INTERNAL, KV_IN), lin_b(ks[8], INTERNAL)  # v_proj
    wo, bo = lin_w(ks[9], E, INTERNAL), lin_b(ks[10], E)            # out_proj
    aq = lin_w(ks[11], R, E)            # A_q: Linear(E, r), bias-free
    bql = lin_w(ks[12], INTERNAL, R)    # B_q: Linear(r, internal), bias-free
    av = lin_w(ks[13], R, KV_IN)        # A_v
    bvl = lin_w(ks[14], INTERNAL, R)    # B_v

    # Kernels consume (in, out)-layout weights (transposed once, outside kernels).
    params = dict(
        wq_t=wq.T, bq=bq, wk_t=wk.T, bk=bk, wv_t=wv.T, bv=bv,
        wo_t=wo.T, bo=bo,
        aq_t=aq.T, bq_lora_t=bql.T, av_t=av.T, bv_lora_t=bvl.T,
    )

    out = attention_lora_forward(q, k, v, params, num_heads=H)
    out = jax.block_until_ready(out)

    # Pure-JAX reference (same math as Attention_LoRA.forward in eval mode,
    # with LoRA applied as separate matmuls — verifies the weight merge too).
    qp = q @ wq.T + bq + (q @ aq.T) @ bql.T
    kp = k @ wk.T + bk
    vp = v @ wv.T + bv + (v @ av.T) @ bvl.T

    def sep(x):
        b, n, ch = x.shape
        return x.reshape(b, n, H, ch // H).transpose(0, 2, 1, 3)

    qh, kh, vh = sep(qp), sep(kp), sep(vp)
    scores = jnp.einsum("bhqc,bhkc->bhqk", qh, kh) / math.sqrt(INTERNAL // H)
    attn = jax.nn.softmax(scores, axis=-1)
    oh = jnp.einsum("bhqk,bhkc->bhqc", attn, vh)
    merged = oh.transpose(0, 2, 1, 3).reshape(B, Nq, INTERNAL)
    ref = merged @ wo.T + bo

    assert out.shape == (B, Nq, E)
    assert jnp.allclose(out, ref, atol=2e-3, rtol=2e-3), (
        f"max abs err {jnp.max(jnp.abs(out - ref))}")
    print("KERNEL_OK")
</pallas_src>

<mosaic_0001>
module attributes {stable_mosaic.version = 11 : i64} {
  func.func @_linear_kernel(%arg0: i32, %arg1: memref<16x32xf32, #tpu.memory_space<vmem>>, %arg2: memref<32x16xf32, #tpu.memory_space<vmem>>, %arg3: memref<1x16xf32, #tpu.memory_space<vmem>>, %arg4: memref<16x16xf32, #tpu.memory_space<vmem>>) attributes {dimension_semantics = [#tpu.dimension_semantics<parallel>], iteration_bounds = array<i64: 1>, scalar_prefetch = 0 : i64, scratch_operands = 0 : i64, tpu.core_type = #tpu.core_type<tc>, window_params = [{transform_indices = @transform_0, window_bounds = array<i64: 16, 32>}, {pipeline_mode = #tpu.pipeline_mode<synchronous>, transform_indices = @transform_1, window_bounds = array<i64: 32, 16>}, {pipeline_mode = #tpu.pipeline_mode<synchronous>, transform_indices = @transform_2, window_bounds = array<i64: 1, 16>}, {transform_indices = @transform_3, window_bounds = array<i64: 16, 16>}]} {
    %c0 = arith.constant 0 : index
    %c0_0 = arith.constant 0 : index
    %0 = vector.load %arg1[%c0, %c0_0] : memref<16x32xf32, #tpu.memory_space<vmem>>, vector<16x32xf32>
    %c0_1 = arith.constant 0 : index
    %c0_2 = arith.constant 0 : index
    %1 = vector.load %arg2[%c0_1, %c0_2] : memref<32x16xf32, #tpu.memory_space<vmem>>, vector<32x16xf32>
    %cst = arith.constant dense<0.000000e+00> : vector<16x16xf32>
    %2 = tpu.matmul %0, %1, %cst {dimension_numbers = #tpu.dot_dimension_numbers<[1], [0], [0], [1], [0, 0, 1, 1], [], []>} : vector<16x32xf32>, vector<32x16xf32>, vector<16x16xf32> -> vector<16x16xf32>
    %c0_3 = arith.constant 0 : index
    %c0_4 = arith.constant 0 : index
    %3 = vector.load %arg3[%c0_3, %c0_4] : memref<1x16xf32, #tpu.memory_space<vmem>>, vector<1x16xf32>
    %4 = vector.broadcast %3 : vector<1x16xf32> to vector<16x16xf32>
    %5 = arith.addf %2, %4 : vector<16x16xf32>
    %c0_5 = arith.constant 0 : index
    %c0_6 = arith.constant 0 : index
    %6 = vector.load %arg4[%c0_5, %c0_6] : memref<16x16xf32, #tpu.memory_space<vmem>>, vector<16x16xf32>
    tpu.vector_store %arg4[%c0_5, %c0_6], %5 {strides = array<i32>} : memref<16x16xf32, #tpu.memory_space<vmem>>, vector<16x16xf32>,
    return
  }
  func.func @transform_0(%arg0: i32) -> (i32, i32) {
    %c0_i32 = arith.constant 0 : i32
    %c0_i32_0 = arith.constant 0 : i32
    return %arg0, %c0_i32 : i32, i32
  }
  func.func @transform_1(%arg0: i32) -> (i32, i32) {
    %c0_i32 = arith.constant 0 : i32
    %c0_i32_0 = arith.constant 0 : i32
    %c0_i32_1 = arith.constant 0 : i32
    return %c0_i32, %c0_i32_0 : i32, i32
  }
  func.func @transform_2(%arg0: i32) -> (i32, i32) {
    %c0_i32 = arith.constant 0 : i32
    %c0_i32_0 = arith.constant 0 : i32
    %c0_i32_1 = arith.constant 0 : i32
    return %c0_i32, %c0_i32_0 : i32, i32
  }
  func.func @transform_3(%arg0: i32) -> (i32, i32) {
    %c0_i32 = arith.constant 0 : i32
    %c0_i32_0 = arith.constant 0 : i32
    return %arg0, %c0_i32 : i32, i32
  }
}

module attributes {stable_mosaic.version = 11 : i64} {
  func.func @_linear_kernel(%arg0: i32, %arg1: memref<24x32xf32, #tpu.memory_space<vmem>>, %arg2: memref<32x16xf32, #tpu.memory_space<vmem>>, %arg3: memref<1x16xf32, #tpu.memory_space<vmem>>, %arg4: memref<24x16xf32, #tpu.memory_space<vmem>>) attributes {dimension_semantics = [#tpu.dimension_semantics<parallel>], iteration_bounds = array<i64: 1>, scalar_prefetch = 0 : i64, scratch_operands = 0 : i64, tpu.core_type = #tpu.core_type<tc>, window_params = [{transform_indices = @transform_0, window_bounds = array<i64: 24, 32>}, {pipeline_mode = #tpu.pipeline_mode<synchronous>, transform_indices = @transform_1, window_bounds = array<i64: 32, 16>}, {pipeline_mode = #tpu.pipeline_mode<synchronous>, transform_indices = @transform_2, window_bounds = array<i64: 1, 16>}, {transform_indices = @transform_3, window_bounds = array<i64: 24, 16>}]} {
    %c0 = arith.constant 0 : index
    %c0_0 = arith.constant 0 : index
    %0 = vector.load %arg1[%c0, %c0_0] : memref<24x32xf32, #tpu.memory_space<vmem>>, vector<24x32xf32>
    %c0_1 = arith.constant 0 : index
    %c0_2 = arith.constant 0 : index
    %1 = vector.load %arg2[%c0_1, %c0_2] : memref<32x16xf32, #tpu.memory_space<vmem>>, vector<32x16xf32>
    %cst = arith.constant dense<0.000000e+00> : vector<24x16xf32>
    %2 = tpu.matmul %0, %1, %cst {dimension_numbers = #tpu.dot_dimension_numbers<[1], [0], [0], [1], [0, 0, 1, 1], [], []>} : vector<24x32xf32>, vector<32x16xf32>, vector<24x16xf32> -> vector<24x16xf32>
    %c0_3 = arith.constant 0 : index
    %c0_4 = arith.constant 0 : index
    %3 = vector.load %arg3[%c0_3, %c0_4] : memref<1x16xf32, #tpu.memory_space<vmem>>, vector<1x16xf32>
    %4 = vector.broadcast %3 : vector<1x16xf32> to vector<24x16xf32>
    %5 = arith.addf %2, %4 : vector<24x16xf32>
    %c0_5 = arith.constant 0 : index
    %c0_6 = arith.constant 0 : index
    %6 = vector.load %arg4[%c0_5, %c0_6] : memref<24x16xf32, #tpu.memory_space<vmem>>, vector<24x16xf32>
    tpu.vector_store %arg4[%c0_5, %c0_6], %5 {strides = array<i32>} : memref<24x16xf32, #tpu.memory_space<vmem>>, vector<24x16xf32>,
    return
  }
  func.func @transform_0(%arg0: i32) -> (i32, i32) {
    %c0_i32 = arith.constant 0 : i32
    %c0_i32_0 = arith.constant 0 : i32
    return %arg0, %c0_i32 : i32, i32
  }
  func.func @transform_1(%arg0: i32) -> (i32, i32) {
    %c0_i32 = arith.constant 0 : i32
    %c0_i32_0 = arith.constant 0 : i32
    %c0_i32_1 = arith.constant 0 : i32
    return %c0_i32, %c0_i32_0 : i32, i32
  }
  func.func @transform_2(%arg0: i32) -> (i32, i32) {
    %c0_i32 = arith.constant 0 : i32
    %c0_i32_0 = arith.constant 0 : i32
    %c0_i32_1 = arith.constant 0 : i32
    return %c0_i32, %c0_i32_0 : i32, i32
  }
  func.func @transform_3(%arg0: i32) -> (i32, i32) {
    %c0_i32 = arith.constant 0 : i32
    %c0_i32_0 = arith.constant 0 : i32
    return %arg0, %c0_i32 : i32, i32
  }
}

module attributes {stable_mosaic.version = 11 : i64} {
  func.func @_sdpa_outproj_kernel(%arg0: i32, %arg1: i32, %arg2: memref<1x8x16xf32, #tpu.memory_space<vmem>>, %arg3: memref<1x128x16xf32, #tpu.memory_space<vmem>>, %arg4: memref<1x128x16xf32, #tpu.memory_space<vmem>>, %arg5: memref<16x32xf32, #tpu.memory_space<vmem>>, %arg6: memref<1x32xf32, #tpu.memory_space<vmem>>, %arg7: memref<1x8x32xf32, #tpu.memory_space<vmem>>, %arg8: memref<2x8x1xf32, #tpu.memory_space<vmem>>, %arg9: memref<2x8x1xf32, #tpu.memory_space<vmem>>, %arg10: memref<8x16xf32, #tpu.memory_space<vmem>>) attributes {dimension_semantics = [#tpu.dimension_semantics<parallel>, #tpu.dimension_semantics<arbitrary>], iteration_bounds = array<i64: 2, 1>, scalar_prefetch = 0 : i64, scratch_operands = 3 : i64, tpu.core_type = #tpu.core_type<tc>, window_params = [{transform_indices = @transform_0, window_bounds = array<i64: 1, 8, 16>}, {transform_indices = @transform_1, window_bounds = array<i64: 1, 128, 16>}, {transform_indices = @transform_2, window_bounds = array<i64: 1, 128, 16>}, {pipeline_mode = #tpu.pipeline_mode<synchronous>, transform_indices = @transform_3, window_bounds = array<i64: 16, 32>}, {pipeline_mode = #tpu.pipeline_mode<synchronous>, transform_indices = @transform_4, window_bounds = array<i64: 1, 32>}, {transform_indices = @transform_5, window_bounds = array<i64: 1, 8, 32>}]} {
    %c0_i32 = arith.constant 0 : i32
    %0 = arith.cmpi eq, %arg1, %c0_i32 : i32
    %1 = arith.extui %0 : i1 to i32
    %c0_i32_0 = arith.constant 0 : i32
    %2 = arith.cmpi ne, %1, %c0_i32_0 : i32
    scf.if %2 {
      %cst_53 = arith.constant 0xFF800000 : f32
      %92 = vector.broadcast %cst_53 : f32 to vector<2x8x1xf32>
      %c0_54 = arith.constant 0 : index
      %c0_55 = arith.constant 0 : index
      %c0_56 = arith.constant 0 : index
      %93 = vector.load %arg8[%c0_54, %c0_55, %c0_56] : memref<2x8x1xf32, #tpu.memory_space<vmem>>, vector<2x8x1xf32>
      tpu.vector_store %arg8[%c0_54, %c0_55, %c0_56], %92 {strides = array<i32>} : memref<2x8x1xf32, #tpu.memory_space<vmem>>, vector<2x8x1xf32>,
      %cst_57 = arith.constant 0.000000e+00 : f32
      %94 = vector.broadcast %cst_57 : f32 to vector<2x8x1xf32>
      %c0_58 = arith.constant 0 : index
      %c0_59 = arith.constant 0 : index
      %c0_60 = arith.constant 0 : index
      %95 = vector.load %arg9[%c0_58, %c0_59, %c0_60] : memref<2x8x1xf32, #tpu.memory_space<vmem>>, vector<2x8x1xf32>
      tpu.vector_store %arg9[%c0_58, %c0_59, %c0_60], %94 {strides = array<i32>} : memref<2x8x1xf32, #tpu.memory_space<vmem>>, vector<2x8x1xf32>,
      %cst_61 = arith.constant 0.000000e+00 : f32
      %96 = vector.broadcast %cst_61 : f32 to vector<8x16xf32>
      %c0_62 = arith.constant 0 : index
      %c0_63 = arith.constant 0 : index
      %97 = vector.load %arg10[%c0_62, %c0_63] : memref<8x16xf32, #tpu.memory_space<vmem>>, vector<8x16xf32>
      tpu.vector_store %arg10[%c0_62, %c0_63], %96 {strides = array<i32>} : memref<8x16xf32, #tpu.memory_space<vmem>>, vector<8x16xf32>,
    } else {
    }
    %c0 = arith.constant 0 : index
    %c0_1 = arith.constant 0 : index
    %c0_2 = arith.constant 0 : index
    %3 = vector.load %arg2[%c0, %c0_1, %c0_2] : memref<1x8x16xf32, #tpu.memory_space<vmem>>, vector<1x8x16xf32>
    %4 = vector.shape_cast %3 : vector<1x8x16xf32> to vector<8x16xf32>
    %c0_3 = arith.constant 0 : index
    %c0_4 = arith.constant 0 : index
    %c0_5 = arith.constant 0 : index
    %5 = vector.load %arg3[%c0_3, %c0_4, %c0_5] : memref<1x128x16xf32, #tpu.memory_space<vmem>>, vector<1x128x16xf32>
    %6 = vector.shape_cast %5 : vector<1x128x16xf32> to vector<128x16xf32>
    %c0_6 = arith.constant 0 : index
    %c0_7 = arith.constant 0 : index
    %c0_8 = arith.constant 0 : index
    %7 = vector.load %arg4[%c0_6, %c0_7, %c0_8] : memref<1x128x16xf32, #tpu.memory_space<vmem>>, vector<1x128x16xf32>
    %8 = vector.shape_cast %7 : vector<1x128x16xf32> to vector<128x16xf32>
    %c128_i32 = arith.constant 128 : i32
    %9 = arith.muli %arg1, %c128_i32 : i32
    %10 = tpu.iota {dimensions = array<i32: 1>} : vector<8x128xi32>
    %11 = vector.broadcast %9 : i32 to vector<8x128xi32>
    %12 = arith.addi %11, %10 : vector<8x128xi32>
    %13 = vector.extract_strided_slice %4 {offsets = [0, 0], sizes = [8, 8], strides = [1, 1]} : vector<8x16xf32> to vector<8x8xf32>
    %14 = vector.extract_strided_slice %6 {offsets = [0, 0], sizes = [128, 8], strides = [1, 1]} : vector<128x16xf32> to vector<128x8xf32>
    %cst = arith.constant dense<0.000000e+00> : vector<8x128xf32>
    %15 = tpu.matmul %13, %14, %cst {dimension_numbers = #tpu.dot_dimension_numbers<[1], [1], [0], [0], [0, 0, 1, 0], [], []>} : vector<8x8xf32>, vector<128x8xf32>, vector<8x128xf32> -> vector<8x128xf32>
    %cst_9 = arith.constant 0.353553385 : f32
    %16 = vector.broadcast %cst_9 : f32 to vector<8x128xf32>
    %17 = arith.mulf %15, %16 : vector<8x128xf32>
    %c12_i32 = arith.constant 12 : i32
    %18 = vector.broadcast %c12_i32 : i32 to vector<8x128xi32>
    %19 = arith.cmpi slt, %12, %18 : vector<8x128xi32>
    %cst_10 = arith.constant 0xFF800000 : f32
    %20 = vector.broadcast %cst_10 : f32 to vector<8x128xf32>
    %21 = arith.select %19, %17, %20 : vector<8x128xi1>, vector<8x128xf32>
    %c0_11 = arith.constant 0 : index
    %c0_12 = arith.constant 0 : index
    %c0_13 = arith.constant 0 : index
    %22 = vector.load %arg8[%c0_11, %c0_12, %c0_13] : memref<2x8x1xf32, #tpu.memory_space<vmem>>, vector<1x8x1xf32>
    %23 = vector.shape_cast %22 : vector<1x8x1xf32> to vector<8x1xf32>
    %cst_14 = arith.constant dense<0xFF800000> : vector<8xf32>
    %24 = vector.multi_reduction <maximumf>, %21, %cst_14 [1] : vector<8x128xf32> to vector<8xf32>
    %25 = vector.shape_cast %24 : vector<8xf32> to vector<8x1xf32>
    %26 = arith.maximumf %23, %25 : vector<8x1xf32>
    %27 = arith.subf %23, %26 : vector<8x1xf32>
    %28 = math.exp %27 : vector<8x1xf32>
    %29 = vector.broadcast %26 : vector<8x1xf32> to vector<8x128xf32>
    %30 = arith.subf %21, %29 : vector<8x128xf32>
    %31 = math.exp %30 : vector<8x128xf32>
    %c0_15 = arith.constant 0 : index
    %c0_16 = arith.constant 0 : index
    %c0_17 = arith.constant 0 : index
    %32 = vector.load %arg9[%c0_15, %c0_16, %c0_17] : memref<2x8x1xf32, #tpu.memory_space<vmem>>, vector<1x8x1xf32>
    %33 = vector.shape_cast %32 : vector<1x8x1xf32> to vector<8x1xf32>
    %34 = arith.mulf %28, %33 : vector<8x1xf32>
    %cst_18 = arith.constant dense<0.000000e+00> : vector<8xf32>
    %35 = vector.multi_reduction <add>, %31, %cst_18 [1] : vector<8x128xf32> to vector<8xf32>
    %36 = vector.shape_cast %35 : vector<8xf32> to vector<8x1xf32>
    %37 = arith.addf %34, %36 : vector<8x1xf32>
    %c0_19 = arith.constant 0 : index
    %c0_20 = arith.constant 0 : index
    %c0_21 = arith.constant 0 : index
    %38 = vector.load %arg9[%c0_19, %c0_20, %c0_21] : memref<2x8x1xf32, #tpu.memory_space<vmem>>, vector<1x8x1xf32>
    %39 = vector.shape_cast %38 : vector<1x8x1xf32> to vector<8x1xf32>
    %40 = vector.shape_cast %37 : vector<8x1xf32> to vector<1x8x1xf32>
    tpu.vector_store %arg9[%c0_19, %c0_20, %c0_21], %40 {strides = array<i32>} : memref<2x8x1xf32, #tpu.memory_space<vmem>>, vector<1x8x1xf32>,
    %c0_22 = arith.constant 0 : index
    %c0_23 = arith.constant 0 : index
    %41 = vector.load %arg10[%c0_22, %c0_23] : memref<8x16xf32, #tpu.memory_space<vmem>>, vector<8x8xf32>
    %42 = vector.broadcast %28 : vector<8x1xf32> to vector<8x8xf32>
    %43 = arith.mulf %42, %41 : vector<8x8xf32>
    %44 = vector.extract_strided_slice %8 {offsets = [0, 0], sizes = [128, 8], strides = [1, 1]} : vector<128x16xf32> to vector<128x8xf32>
    %cst_24 = arith.constant dense<0.000000e+00> : vector<8x8xf32>
    %45 = tpu.matmul %31, %44, %cst_24 {dimension_numbers = #tpu.dot_dimension_numbers<[1], [0], [0], [1], [0, 0, 1, 1], [], []>} : vector<8x128xf32>, vector<128x8xf32>, vector<8x8xf32> -> vector<8x8xf32>
    %46 = arith.addf %43, %45 : vector<8x8xf32>
    %c0_25 = arith.constant 0 : index
    %c0_26 = arith.constant 0 : index
    %47 = vector.load %arg10[%c0_25, %c0_26] : memref<8x16xf32, #tpu.memory_space<vmem>>, vector<8x8xf32>
    tpu.vector_store %arg10[%c0_25, %c0_26], %46 {strides = array<i32>} : memref<8x16xf32, #tpu.memory_space<vmem>>, vector<8x8xf32>,
    %c0_27 = arith.constant 0 : index
    %c0_28 = arith.constant 0 : index
    %c0_29 = arith.constant 0 : index
    %48 = vector.load %arg8[%c0_27, %c0_28, %c0_29] : memref<2x8x1xf32, #tpu.memory_space<vmem>>, vector<1x8x1xf32>
    %49 = vector.shape_cast %48 : vector<1x8x1xf32> to vector<8x1xf32>
    %50 = vector.shape_cast %26 : vector<8x1xf32> to vector<1x8x1xf32>
    tpu.vector_store %arg8[%c0_27, %c0_28, %c0_29], %50 {strides = array<i32>} : memref<2x8x1xf32, #tpu.memory_space<vmem>>, vector<1x8x1xf32>,
    %51 = vector.extract_strided_slice %4 {offsets = [0, 8], sizes = [8, 8], strides = [1, 1]} : vector<8x16xf32> to vector<8x8xf32>
    %52 = vector.extract_strided_slice %6 {offsets = [0, 8], sizes = [128, 8], strides = [1, 1]} : vector<128x16xf32> to vector<128x8xf32>
    %cst_30 = arith.constant dense<0.000000e+00> : vector<8x128xf32>
    %53 = tpu.matmul %51, %52, %cst_30 {dimension_numbers = #tpu.dot_dimension_numbers<[1], [1], [0], [0], [0, 0, 1, 0], [], []>} : vector<8x8xf32>, vector<128x8xf32>, vector<8x128xf32> -> vector<8x128xf32>
    %cst_31 = arith.constant 0.353553385 : f32
    %54 = vector.broadcast %cst_31 : f32 to vector<8x128xf32>
    %55 = arith.mulf %53, %54 : vector<8x128xf32>
    %c12_i32_32 = arith.constant 12 : i32
    %56 = vector.broadcast %c12_i32_32 : i32 to vector<8x128xi32>
    %57 = arith.cmpi slt, %12, %56 : vector<8x128xi32>
    %cst_33 = arith.constant 0xFF800000 : f32
    %58 = vector.broadcast %cst_33 : f32 to vector<8x128xf32>
    %59 = arith.select %57, %55, %58 : vector<8x128xi1>, vector<8x128xf32>
    %c1 = arith.constant 1 : index
    %c0_34 = arith.constant 0 : index
    %c0_35 = arith.constant 0 : index
    %60 = vector.load %arg8[%c1, %c0_34, %c0_35] : memref<2x8x1xf32, #tpu.memory_space<vmem>>, vector<1x8x1xf32>
    %61 = vector.shape_cast %60 : vector<1x8x1xf32> to vector<8x1xf32>
    %cst_36 = arith.constant dense<0xFF800000> : vector<8xf32>
    %62 = vector.multi_reduction <maximumf>, %59, %cst_36 [1] : vector<8x128xf32> to vector<8xf32>
    %63 = vector.shape_cast %62 : vector<8xf32> to vector<8x1xf32>
    %64 = arith.maximumf %61, %63 : vector<8x1xf32>
    %65 = arith.subf %61, %64 : vector<8x1xf32>
    %66 = math.exp %65 : vector<8x1xf32>
    %67 = vector.broadcast %64 : vector<8x1xf32> to vector<8x128xf32>
    %68 = arith.subf %59, %67 : vector<8x128xf32>
    %69 = math.exp %68 : vector<8x128xf32>
    %c1_37 = arith.constant 1 : index
    %c0_38 = arith.constant 0 : index
    %c0_39 = arith.constant 0 : index
    %70 = vector.load %arg9[%c1_37, %c0_38, %c0_39] : memref<2x8x1xf32, #tpu.memory_space<vmem>>, vector<1x8x1xf32>
    %71 = vector.shape_cast %70 : vector<1x8x1xf32> to vector<8x1xf32>
    %72 = arith.mulf %66, %71 : vector<8x1xf32>
    %cst_40 = arith.constant dense<0.000000e+00> : vector<8xf32>
    %73 = vector.multi_reduction <add>, %69, %cst_40 [1] : vector<8x128xf32> to vector<8xf32>
    %74 = vector.shape_cast %73 : vector<8xf32> to vector<8x1xf32>
    %75 = arith.addf %72, %74 : vector<8x1xf32>
    %c1_41 = arith.constant 1 : index
    %c0_42 = arith.constant 0 : index
    %c0_43 = arith.constant 0 : index
    %76 = vector.load %arg9[%c1_41, %c0_42, %c0_43] : memref<2x8x1xf32, #tpu.memory_space<vmem>>, vector<1x8x1xf32>
    %77 = vector.shape_cast %76 : vector<1x8x1xf32> to vector<8x1xf32>
    %78 = vector.shape_cast %75 : vector<8x1xf32> to vector<1x8x1xf32>
    tpu.vector_store %arg9[%c1_41, %c0_42, %c0_43], %78 {strides = array<i32>} : memref<2x8x1xf32, #tpu.memory_space<vmem>>, vector<1x8x1xf32>,
    %c0_44 = arith.constant 0 : index
    %c8 = arith.constant 8 : index
    %79 = vector.load %arg10[%c0_44, %c8] : memref<8x16xf32, #tpu.memory_space<vmem>>, vector<8x8xf32>
    %80 = vector.broadcast %66 : vector<8x1xf32> to vector<8x8xf32>
    %81 = arith.mulf %80, %79 : vector<8x8xf32>
    %82 = vector.extract_strided_slice %8 {offsets = [0, 8], sizes = [128, 8], strides = [1, 1]} : vector<128x16xf32> to vector<128x8xf32>
    %cst_45 = arith.constant dense<0.000000e+00> : vector<8x8xf32>
    %83 = tpu.matmul %69, %82, %cst_45 {dimension_numbers = #tpu.dot_dimension_numbers<[1], [0], [0], [1], [0, 0, 1, 1], [], []>} : vector<8x128xf32>, vector<128x8xf32>, vector<8x8xf32> -> vector<8x8xf32>
    %84 = arith.addf %81, %83 : vector<8x8xf32>
    %c0_46 = arith.constant 0 : index
    %c8_47 = arith.constant 8 : index
    %85 = vector.load %arg10[%c0_46, %c8_47] : memref<8x16xf32, #tpu.memory_space<vmem>>, vector<8x8xf32>
    tpu.vector_store %arg10[%c0_46, %c8_47], %84 {strides = array<i32>} : memref<8x16xf32, #tpu.memory_space<vmem>>, vector<8x8xf32>,
    %c1_48 = arith.constant 1 : index
    %c0_49 = arith.constant 0 : index
    %c0_50 = arith.constant 0 : index
    %86 = vector.load %arg8[%c1_48, %c0_49, %c0_50] : memref<2x8x1xf32, #tpu.memory_space<vmem>>, vector<1x8x1xf32>
    %87 = vector.shape_cast %86 : vector<1x8x1xf32> to vector<8x1xf32>
    %88 = vector.shape_cast %64 : vector<8x1xf32> to vector<1x8x1xf32>
    tpu.vector_store %arg8[%c1_48, %c0_49, %c0_50], %88 {strides = array<i32>} : memref<2x8x1xf32, #tpu.memory_space<vmem>>, vector<1x8x1xf32>,
    %c0_i32_51 = arith.constant 0 : i32
    %89 = arith.cmpi eq, %arg1, %c0_i32_51 : i32
    %90 = arith.extui %89 : i1 to i32
    %c0_i32_52 = arith.constant 0 : i32
    %91 = arith.cmpi ne, %90, %c0_i32_52 : i32
    scf.if %91 {
      %c0_53 = arith.constant 0 : index
      %c0_54 = arith.constant 0 : index
      %c0_55 = arith.constant 0 : index
      %92 = vector.load %arg9[%c0_53, %c0_54, %c0_55] : memref<2x8x1xf32, #tpu.memory_space<vmem>>, vector<1x8x1xf32>
      %93 = vector.shape_cast %92 : vector<1x8x1xf32> to vector<8x1xf32>
      %94 = tpu.reciprocal %93 {approx = true} : vector<8x1xf32> -> vector<8x1xf32>
      %c0_56 = arith.constant 0 : index
      %c0_57 = arith.constant 0 : index
      %95 = vector.load %arg10[%c0_56, %c0_57] : memref<8x16xf32, #tpu.memory_space<vmem>>, vector<8x8xf32>
      %96 = vector.broadcast %94 : vector<8x1xf32> to vector<8x8xf32>
      %97 = arith.mulf %95, %96 : vector<8x8xf32>
      %c0_58 = arith.constant 0 : index
      %c0_59 = arith.constant 0 : index
      %98 = vector.load %arg10[%c0_58, %c0_59] : memref<8x16xf32, #tpu.memory_space<vmem>>, vector<8x8xf32>
      tpu.vector_store %arg10[%c0_58, %c0_59], %97 {strides = array<i32>} : memref<8x16xf32, #tpu.memory_space<vmem>>, vector<8x8xf32>,
      %c1_60 = arith.constant 1 : index
      %c0_61 = arith.constant 0 : index
      %c0_62 = arith.constant 0 : index
      %99 = vector.load %arg9[%c1_60, %c0_61, %c0_62] : memref<2x8x1xf32, #tpu.memory_space<vmem>>, vector<1x8x1xf32>
      %100 = vector.shape_cast %99 : vector<1x8x1xf32> to vector<8x1xf32>
      %101 = tpu.reciprocal %100 {approx = true} : vector<8x1xf32> -> vector<8x1xf32>
      %c0_63 = arith.constant 0 : index
      %c8_64 = arith.constant 8 : index
      %102 = vector.load %arg10[%c0_63, %c8_64] : memref<8x16xf32, #tpu.memory_space<vmem>>, vector<8x8xf32>
      %103 = vector.broadcast %101 : vector<8x1xf32> to vector<8x8xf32>
      %104 = arith.mulf %102, %103 : vector<8x8xf32>
      %c0_65 = arith.constant 0 : index
      %c8_66 = arith.constant 8 : index
      %105 = vector.load %arg10[%c0_65, %c8_66] : memref<8x16xf32, #tpu.memory_space<vmem>>, vector<8x8xf32>
      tpu.vector_store %arg10[%c0_65, %c8_66], %104 {strides = array<i32>} : memref<8x16xf32, #tpu.memory_space<vmem>>, vector<8x8xf32>,
      %c0_67 = arith.constant 0 : index
      %c0_68 = arith.constant 0 : index
      %106 = vector.load %arg10[%c0_67, %c0_68] : memref<8x16xf32, #tpu.memory_space<vmem>>, vector<8x16xf32>
      %c0_69 = arith.constant 0 : index
      %c0_70 = arith.constant 0 : index
      %107 = vector.load %arg5[%c0_69, %c0_70] : memref<16x32xf32, #tpu.memory_space<vmem>>, vector<16x32xf32>
      %cst_71 = arith.constant dense<0.000000e+00> : vector<8x32xf32>
      %108 = tpu.matmul %106, %107, %cst_71 {dimension_numbers = #tpu.dot_dimension_numbers<[1], [0], [0], [1], [0, 0, 1, 1], [], []>} : vector<8x16xf32>, vector<16x32xf32>, vector<8x32xf32> -> vector<8x32xf32>
      %c0_72 = arith.constant 0 : index
      %c0_73 = arith.constant 0 : index
      %109 = vector.load %arg6[%c0_72, %c0_73] : memref<1x32xf32, #tpu.memory_space<vmem>>, vector<1x32xf32>
      %110 = vector.broadcast %109 : vector<1x32xf32> to vector<8x32xf32>
      %111 = arith.addf %108, %110 : vector<8x32xf32>
      %c0_74 = arith.constant 0 : index
      %c0_75 = arith.constant 0 : index
      %c0_76 = arith.constant 0 : index
      %112 = vector.load %arg7[%c0_74, %c0_75, %c0_76] : memref<1x8x32xf32, #tpu.memory_space<vmem>>, vector<1x8x32xf32>
      %113 = vector.shape_cast %112 : vector<1x8x32xf32> to vector<8x32xf32>
      %114 = vector.shape_cast %111 : vector<8x32xf32> to vector<1x8x32xf32>
      tpu.vector_store %arg7[%c0_74, %c0_75, %c0_76], %114 {strides = array<i32>} : memref<1x8x32xf32, #tpu.memory_space<vmem>>, vector<1x8x32xf32>,
    } else {
    }
    return
  }
  func.func @transform_0(%arg0: i32, %arg1: i32) -> (i32, i32, i32) {
    %c0_i32 = arith.constant 0 : i32
    %c0_i32_0 = arith.constant 0 : i32
    %c0_i32_1 = arith.constant 0 : i32
    return %arg0, %c0_i32, %c0_i32_0 : i32, i32, i32
  }
  func.func @transform_1(%arg0: i32, %arg1: i32) -> (i32, i32, i32) {
    %c0_i32 = arith.constant 0 : i32
    %c0_i32_0 = arith.constant 0 : i32
    return %arg0, %arg1, %c0_i32 : i32, i32, i32
  }
  func.func @transform_2(%arg0: i32, %arg1: i32) -> (i32, i32, i32) {
    %c0_i32 = arith.constant 0 : i32
    %c0_i32_0 = arith.constant 0 : i32
    return %arg0, %arg1, %c0_i32 : i32, i32, i32
  }
  func.func @transform_3(%arg0: i32, %arg1: i32) -> (i32, i32) {
    %c0_i32 = arith.constant 0 : i32
    %c0_i32_0 = arith.constant 0 : i32
    %c0_i32_1 = arith.constant 0 : i32
    return %c0_i32, %c0_i32_0 : i32, i32
  }
  func.func @transform_4(%arg0: i32, %arg1: i32) -> (i32, i32) {
    %c0_i32 = arith.constant 0 : i32
    %c0_i32_0 = arith.constant 0 : i32
    %c0_i32_1 = arith.constant 0 : i32
    return %c0_i32, %c0_i32_0 : i32, i32
  }
  func.func @transform_5(%arg0: i32, %arg1: i32) -> (i32, i32, i32) {
    %c0_i32 = arith.constant 0 : i32
    %c0_i32_0 = arith.constant 0 : i32
    %c0_i32_1 = arith.constant 0 : i32
    return %arg0, %c0_i32, %c0_i32_0 : i32, i32, i32
  }
}

</mosaic_0001>

<llo_original>
// kernel: attention_lora_forward.4
$region0: #{attention_lora_forward.4}
  #allocation0 [shape = 'u32[]', space=smem, size = 0x4, offset = 0x4, fixed_abs, tag = 'smem constant byte address 0x4 - core index']
  #allocation1 [shape = 'u32[144,128]{1,0:T(1,128)}', space=vmem, size = 0x12000, scoped, tag = 'internal scratch']
  %s0 = inlined_call_operand.vmem [shape: f32[16,32], index: 0, kind: input, shape index: {}]
  %s1 = inlined_call_operand.vmem [shape: f32[32,16], index: 1, kind: input, shape index: {}]
  %s2 = inlined_call_operand.vmem [shape: f32[1,16], index: 2, kind: input, shape index: {}]
  %s3 = inlined_call_operand.vmem [shape: f32[16,16], index: 3, kind: output, shape index: {}]
  %s4 = sld [smem:[#allocation0]]
  $region22: #{attention_lora_forward.4} parent=0
    _
  %s6 = ssub.s32 1, %s4
  %s7 = scalar_select 0, %s6, %s4
  // Predicated region
  $region2: #{attention_lora_forward.4} parent=0 // pred_check
    _
  $region3: #{attention_lora_forward.4} parent=0 // pred_check_branch
    %9 = sbr.rel (0) target = $region5
  $region4: #{attention_lora_forward.4} parent=0 // pred_region
    _
  $region5: #{attention_lora_forward.4} parent=0 // pred_fallthru
    _
  // Predicated region
  $region6: #{attention_lora_forward.4} parent=0 // pred_check
    _
  $region7: #{attention_lora_forward.4} parent=0 // pred_check_branch
    %11 = sbr.rel (0) target = $region9
  $region8: #{attention_lora_forward.4} parent=0 // pred_region
    _
  $region9: #{attention_lora_forward.4} parent=0 // pred_fallthru
    _
  // Predicated region
  $region10: #{attention_lora_forward.4} parent=0 // pred_check
    _
  $region11: #{attention_lora_forward.4} parent=0 // pred_check_branch
    %13 = sbr.rel (0) target = $region13
  $region12: #{attention_lora_forward.4} parent=0 // pred_region
    _
  $region13: #{attention_lora_forward.4} parent=0 // pred_fallthru
    _
  %v14 = vld [vmem:[%s0] sm:$0xff]
  %v15 = vld [vmem:[%s0 + $0x8] sm:$0xff]
  %v16 = vld [vmem:[%s1] sm:$0xff]
  %v17 = vld [vmem:[%s1 + $0x8] sm:$0xff]
  %v18 = vld [vmem:[%s1 + $0x10] sm:$0xff]
  %v19 = vld [vmem:[%s1 + $0x18] sm:$0xff]
  %v20 = vld [vmem:[%s2] sm:$0x1]
  %v22 = vlaneseq
  %v23 = vshrl.u32 %v22, 7
  %v24 = vsub.s32 0, %v23
  %v25 = vrot.slane %v20, %v24
  %vm27 = vcmask 261120
  %v29 = vsel %vm27, %v14, 0
  %v32 = vsel %vm27, %v15, 0
  %34 = vmatprep.subr.mxu0 0.0
  %35 = vmatpush1.msra.mxu0 %v16
  %36 = vmatprep.subr.mxu0 0.0
  %37 = vmatpush1.msra.mxu0 %v17
  %38 = vmatprep.subr.mxu0 0.0
  %39 = vmatpush1.msra.mxu0 %v18
  %40 = vmatprep.subr.mxu0 0.0
  %41 = vmatpush1.msra.mxu0 %v19
  %42 = vmatprep.subr.mxu0 0.0
  %43 = vmatpush1.msra.mxu0 0.0
  %44 = vmatprep.subr.mxu0 0.0
  %45 = vmatpush1.msra.mxu0 0.0
  %46 = vmatprep.subr.mxu0 0.0
  %47 = vmatpush1.msra.mxu0 0.0
  %48 = vmatprep.subr.mxu0 0.0
  %49 = vmatpush1.msra.mxu0 0.0
  %50 = vmatprep.subr.mxu0 0.0
  %51 = vmatpush1.msra.mxu0 0.0
  %52 = vmatprep.subr.mxu0 0.0
  %53 = vmatpush1.msra.mxu0 0.0
  %54 = vmatprep.subr.mxu0 0.0
  %55 = vmatpush1.msra.mxu0 0.0
  %56 = vmatprep.subr.mxu0 0.0
  %57 = vmatpush1.msra.mxu0 0.0
  %58 = vmatprep.subr.mxu0 0.0
  %59 = vmatpush1.msra.mxu0 0.0
  %60 = vmatprep.subr.mxu0 0.0
  %61 = vmatpush1.msra.mxu0 0.0
  %62 = vmatprep.subr.mxu0 0.0
  %63 = vmatpush1.msra.mxu0 0.0
  %64 = vmatprep.subr.mxu0 0.0
  %65 = vmatpush1.msra.mxu0 0.0
  %66 = vmatprep.subr.mxu0 0.0
  %67 = vmatpush1.msra.mxu0 0.0
  %68 = vmatprep.subr.mxu0 0.0
  %69 = vmatpush1.msra.mxu0 0.0
  %70 = vmatprep.subr.mxu0 0.0
  %71 = vmatpush1.msra.mxu0 0.0
  %72 = vmatprep.subr.mxu0 0.0
  %73 = vmatpush1.msra.mxu0 0.0
  %74 = vmatprep.subr.mxu0 0.0
  %75 = vmatpush1.msra.mxu0 0.0
  %76 = vmatprep.subr.mxu0 0.0
  %77 = vmatpush1.msra.mxu0 0.0
  %78 = vmatprep.subr.mxu0 0.0
  %79 = vmatpush1.msra.mxu0 0.0
  %80 = vmatprep.subr.mxu0 0.0
  %81 = vmatpush1.msra.mxu0 0.0
  %82 = vmatprep.subr.mxu0 0.0
  %83 = vmatpush1.msra.mxu0 0.0
  %84 = vmatprep.subr.mxu0 0.0
  %85 = vmatpush1.msra.mxu0 0.0
  %86 = vmatprep.subr.mxu0 0.0
  %87 = vmatpush1.msra.mxu0 0.0
  %88 = vmatprep.subr.mxu0 0.0
  %89 = vmatpush1.msra.mxu0 0.0
  %90 = vmatprep.subr.mxu0 0.0
  %91 = vmatpush1.msra.mxu0 0.0
  %92 = vmatprep.subr.mxu0 0.0
  %93 = vmatpush1.msra.mxu0 0.0
  %94 = vmatprep.subr.mxu0 0.0
  %95 = vmatpush1.msra.mxu0 0.0
  %96 = vmatprep.subr.mxu0 0.0
  %97 = vmatpush1.msra.mxu0 0.0
  %98 = vmatprep.mubr.f32.mxu0 0.0
  %99 = vmatmul.mubr.f32.gmra.mrb[0].mxu0 %v29
  %v100 = vpop.f32.mrb[0].mxu0
  %v101 = vadd.f32 %v25, %v100
  %v102 = vpop.f32.mrb[0].mxu0
  %103 = vmatprep.mubr.f32.mxu0 0.0
  %104 = vmatmul.mubr.f32.gmra.mrb[0].mxu0 %v32
  %v105 = vpop.f32.mrb[0].mxu0
  %v106 = vadd.f32 %v25, %v105
  %v107 = vpop.f32.mrb[0].mxu0
  %108 = vdwg.mxu0
  %vm109 = vcmask 130048
  %110 = vst.msk [vmem:[%s3] sm:$0xff] %vm109, %v101
  %111 = vst.msk [vmem:[%s3 + $0x8] sm:$0xff] %vm109, %v106
  // Predicated region
  $region14: #{attention_lora_forward.4} parent=0 // pred_check
    _
  $region15: #{attention_lora_forward.4} parent=0 // pred_check_branch
    %113 = sbr.rel (0) target = $region17
  $region16: #{attention_lora_forward.4} parent=0 // pred_region
    _
  $region17: #{attention_lora_forward.4} parent=0 // pred_fallthru
    _
  // Predicated region
  $region18: #{attention_lora_forward.4} parent=0 // pred_check
    _
  $region19: #{attention_lora_forward.4} parent=0 // pred_check_branch
    %115 = sbr.rel (0) target = $region21
  $region20: #{attention_lora_forward.4} parent=0 // pred_region
    _
  $region21: #{attention_lora_forward.4} parent=0 // pred_fallthru
    _

// kernel: attention_lora_forward.6
$region0: #{attention_lora_forward.6}
  #allocation0 [shape = 'u32[]', space=smem, size = 0x4, offset = 0x4, fixed_abs, tag = 'smem constant byte address 0x4 - core index']
  #allocation1 [shape = 'u32[144,128]{1,0:T(1,128)}', space=vmem, size = 0x12000, scoped, tag = 'internal scratch']
  %s0 = inlined_call_operand.vmem [shape: f32[24,32], index: 0, kind: input, shape index: {}]
  %s1 = inlined_call_operand.vmem [shape: f32[32,16], index: 1, kind: input, shape index: {}]
  %s2 = inlined_call_operand.vmem [shape: f32[1,16], index: 2, kind: input, shape index: {}]
  %s3 = inlined_call_operand.vmem [shape: f32[24,16], index: 3, kind: output, shape index: {}]
  %s4 = sld [smem:[#allocation0]]
  $region22: #{attention_lora_forward.6} parent=0
    _
  %s6 = ssub.s32 1, %s4
  %s7 = scalar_select 0, %s6, %s4
  // Predicated region
  $region2: #{attention_lora_forward.6} parent=0 // pred_check
    _
  $region3: #{attention_lora_forward.6} parent=0 // pred_check_branch
    %9 = sbr.rel (0) target = $region5
  $region4: #{attention_lora_forward.6} parent=0 // pred_region
    _
  $region5: #{attention_lora_forward.6} parent=0 // pred_fallthru
    _
  // Predicated region
  $region6: #{attention_lora_forward.6} parent=0 // pred_check
    _
  $region7: #{attention_lora_forward.6} parent=0 // pred_check_branch
    %11 = sbr.rel (0) target = $region9
  $region8: #{attention_lora_forward.6} parent=0 // pred_region
    _
  $region9: #{attention_lora_forward.6} parent=0 // pred_fallthru
    _
  // Predicated region
  $region10: #{attention_lora_forward.6} parent=0 // pred_check
    _
  $region11: #{attention_lora_forward.6} parent=0 // pred_check_branch
    %13 = sbr.rel (0) target = $region13
  $region12: #{attention_lora_forward.6} parent=0 // pred_region
    _
  $region13: #{attention_lora_forward.6} parent=0 // pred_fallthru
    _
  %v14 = vld [vmem:[%s0] sm:$0xff]
  %v15 = vld [vmem:[%s0 + $0x8] sm:$0xff]
  %v16 = vld [vmem:[%s0 + $0x10] sm:$0xff]
  %v17 = vld [vmem:[%s1] sm:$0xff]
  %v18 = vld [vmem:[%s1 + $0x8] sm:$0xff]
  %v19 = vld [vmem:[%s1 + $0x10] sm:$0xff]
  %v20 = vld [vmem:[%s1 + $0x18] sm:$0xff]
  %v21 = vld [vmem:[%s2] sm:$0x1]
  %v23 = vlaneseq
  %v24 = vshrl.u32 %v23, 7
  %v25 = vsub.s32 0, %v24
  %v26 = vrot.slane %v21, %v25
  %vm28 = vcmask 261120
  %v30 = vsel %vm28, %v14, 0
  %v33 = vsel %vm28, %v15, 0
  %v36 = vsel %vm28, %v16, 0
  %38 = vmatprep.subr.mxu0 0.0
  %39 = vmatpush1.msra.mxu0 %v17
  %40 = vmatprep.subr.mxu0 0.0
  %41 = vmatpush1.msra.mxu0 %v18
  %42 = vmatprep.subr.mxu0 0.0
  %43 = vmatpush1.msra.mxu0 %v19
  %44 = vmatprep.subr.mxu0 0.0
  %45 = vmatpush1.msra.mxu0 %v20
  %46 = vmatprep.subr.mxu0 0.0
  %47 = vmatpush1.msra.mxu0 0.0
  %48 = vmatprep.subr.mxu0 0.0
  %49 = vmatpush1.msra.mxu0 0.0
  %50 = vmatprep.subr.mxu0 0.0
  %51 = vmatpush1.msra.mxu0 0.0
  %52 = vmatprep.subr.mxu0 0.0
  %53 = vmatpush1.msra.mxu0 0.0
  %54 = vmatprep.subr.mxu0 0.0
  %55 = vmatpush1.msra.mxu0 0.0
  %56 = vmatprep.subr.mxu0 0.0
  %57 = vmatpush1.msra.mxu0 0.0
  %58 = vmatprep.subr.mxu0 0.0
  %59 = vmatpush1.msra.mxu0 0.0
  %60 = vmatprep.subr.mxu0 0.0
  %61 = vmatpush1.msra.mxu0 0.0
  %62 = vmatprep.subr.mxu0 0.0
  %63 = vmatpush1.msra.mxu0 0.0
  %64 = vmatprep.subr.mxu0 0.0
  %65 = vmatpush1.msra.mxu0 0.0
  %66 = vmatprep.subr.mxu0 0.0
  %67 = vmatpush1.msra.mxu0 0.0
  %68 = vmatprep.subr.mxu0 0.0
  %69 = vmatpush1.msra.mxu0 0.0
  %70 = vmatprep.subr.mxu0 0.0
  %71 = vmatpush1.msra.mxu0 0.0
  %72 = vmatprep.subr.mxu0 0.0
  %73 = vmatpush1.msra.mxu0 0.0
  %74 = vmatprep.subr.mxu0 0.0
  %75 = vmatpush1.msra.mxu0 0.0
  %76 = vmatprep.subr.mxu0 0.0
  %77 = vmatpush1.msra.mxu0 0.0
  %78 = vmatprep.subr.mxu0 0.0
  %79 = vmatpush1.msra.mxu0 0.0
  %80 = vmatprep.subr.mxu0 0.0
  %81 = vmatpush1.msra.mxu0 0.0
  %82 = vmatprep.subr.mxu0 0.0
  %83 = vmatpush1.msra.mxu0 0.0
  %84 = vmatprep.subr.mxu0 0.0
  %85 = vmatpush1.msra.mxu0 0.0
  %86 = vmatprep.subr.mxu0 0.0
  %87 = vmatpush1.msra.mxu0 0.0
  %88 = vmatprep.subr.mxu0 0.0
  %89 = vmatpush1.msra.mxu0 0.0
  %90 = vmatprep.subr.mxu0 0.0
  %91 = vmatpush1.msra.mxu0 0.0
  %92 = vmatprep.subr.mxu0 0.0
  %93 = vmatpush1.msra.mxu0 0.0
  %94 = vmatprep.subr.mxu0 0.0
  %95 = vmatpush1.msra.mxu0 0.0
  %96 = vmatprep.subr.mxu0 0.0
  %97 = vmatpush1.msra.mxu0 0.0
  %98 = vmatprep.subr.mxu0 0.0
  %99 = vmatpush1.msra.mxu0 0.0
  %100 = vmatprep.subr.mxu0 0.0
  %101 = vmatpush1.msra.mxu0 0.0
  %102 = vmatprep.mubr.f32.mxu0 0.0
  %103 = vmatmul.mubr.f32.gmra.mrb[0].mxu0 %v30
  %v104 = vpop.f32.mrb[0].mxu0
  %v105 = vadd.f32 %v26, %v104
  %v106 = vpop.f32.mrb[0].mxu0
  %107 = vmatprep.mubr.f32.mxu0 0.0
  %108 = vmatmul.mubr.f32.gmra.mrb[0].mxu0 %v33
  %v109 = vpop.f32.mrb[0].mxu0
  %v110 = vadd.f32 %v26, %v109
  %v111 = vpop.f32.mrb[0].mxu0
  %112 = vmatprep.mubr.f32.mxu0 0.0
  %113 = vmatmul.mubr.f32.gmra.mrb[0].mxu0 %v36
  %v114 = vpop.f32.mrb[0].mxu0
  %v115 = vadd.f32 %v26, %v114
  %v116 = vpop.f32.mrb[0].mxu0
  %117 = vdwg.mxu0
  %vm118 = vcmask 130048
  %119 = vst.msk [vmem:[%s3] sm:$0xff] %vm118, %v105
  %120 = vst.msk [vmem:[%s3 + $0x8] sm:$0xff] %vm118, %v110
  %121 = vst.msk [vmem:[%s3 + $0x10] sm:$0xff] %vm118, %v115
  // Predicated region
  $region14: #{attention_lora_forward.6} parent=0 // pred_check
    _
  $region15: #{attention_lora_forward.6} parent=0 // pred_check_branch
    %123 = sbr.rel (0) target = $region17
  $region16: #{attention_lora_forward.6} parent=0 // pred_region
    _
  $region17: #{attention_lora_forward.6} parent=0 // pred_fallthru
    _
  // Predicated region
  $region18: #{attention_lora_forward.6} parent=0 // pred_check
    _
  $region19: #{attention_lora_forward.6} parent=0 // pred_check_branch
    %125 = sbr.rel (0) target = $region21
  $region20: #{attention_lora_forward.6} parent=0 // pred_region
    _
  $region21: #{attention_lora_forward.6} parent=0 // pred_fallthru
    _

// kernel: attention_lora_forward.7
$region0: #{attention_lora_forward.7}
  #allocation0 [shape = 'u32[]', space=smem, size = 0x4, offset = 0x4, fixed_abs, tag = 'smem constant byte address 0x4 - core index']
  #allocation1 [shape = 'u32[144,128]{1,0:T(1,128)}', space=vmem, size = 0x12000, scoped, tag = 'internal scratch']
  #allocation2 [shape = 'f32[2,8,1]{2,1,0:T(8,128)}', space=vmem, size = 0x2000, scoped, tag = 'scratch operand']
  #allocation3 [shape = 'f32[2,8,1]{2,1,0:T(8,128)}', space=vmem, size = 0x2000, scoped, tag = 'scratch operand']
  #allocation4 [shape = 'f32[8,16]{1,0:T(8,128)}', space=vmem, size = 0x1000, scoped, tag = 'scratch operand']
  %s0 = inlined_call_operand.vmem [shape: f32[2,8,16], index: 0, kind: input, shape index: {}]
  %s1 = inlined_call_operand.vmem [shape: f32[2,128,16], index: 1, kind: input, shape index: {}]
  %s2 = inlined_call_operand.vmem [shape: f32[2,128,16], index: 2, kind: input, shape index: {}]
  %s3 = inlined_call_operand.vmem [shape: f32[16,32], index: 3, kind: input, shape index: {}]
  %s4 = inlined_call_operand.vmem [shape: f32[1,32], index: 4, kind: input, shape index: {}]
  %s5 = inlined_call_operand.hbm [shape: f32[2,8,32], index: 5, kind: output, shape index: {}]
  %s6 = sld [smem:[#allocation0]]
  $region61: #{attention_lora_forward.7} parent=0
    _
  %s8 = ssub.s32 1, %s6
  %s9 = scalar_select 0, %s8, %s6
  $region1: #{attention_lora_forward.7} parent=0
    #allocation5 [shape = 'u8[8192]{0}', space=vmem, size = 0x2000, scoped, tag = 'output window, operand 0']
    #allocation6 [shape = 's32[2]{0}', space=sflag, size = 0x8, scoped, tag = 'scoped memory for attention_lora_forward.7']
    %10 = vsyncpa [#allocation6], 0
    %s11 = scalar_lea.sflag [#allocation6], 1
    %12 = vsyncpa %s11, 0
    loop: start=0, step=1, limit=4
    $region2: #{attention_lora_forward.7} parent=1 // loop_pre_header
      _
    $region3: #{attention_lora_forward.7} parent=1 // loop_header
      %s14 = sphi 0, %s18
      %p15 = scmp.ge.s32.totalorder %s14, 4
      %s21 = sphi 0, %s33
      %s22 = sphi 0, %s29
      %s23 = sphi 0, %s21
      %s24 = sphi 0, %s22
      %s25 = sphi 0, %s23
      %s26 = sphi 0, %s24
      %s36 = sphi 0, %s38
      %s39 = sphi 0, %s36
      %s40 = sphi 0, %s39
      %s56 = sphi 0, %s40
      %s64 = sphi 0, %s66
      %s67 = sphi 0, %s64
      %s68 = sphi 0, %s67
      %s84 = sphi 0, %s68
      %s92 = sphi 0, %s94
      %s95 = sphi 0, %s92
      %s96 = sphi 0, %s95
      %s112 = sphi 0, %s96
      %s116 = sphi 0, %s116
      %s118 = sphi 0, %s116
      %s119 = sphi 0, %s118
      %s133 = sphi 0, %s119
      %s137 = sphi 0, %s137
      %s139 = sphi 0, %s137
      %s140 = sphi 0, %s139
      %s154 = sphi 0, %s140
      %s160 = sphi 0, %s162
      %s163 = sphi 0, %s160
      %s164 = sphi 0, %s163
      %s180 = sphi 0, %s164
    $region4: #{attention_lora_forward.7} parent=1 // loop_header_branch
      %17 = sbr.rel (%p15) target = $region8
    $region5: #{attention_lora_forward.7} parent=1 // loop_body
      %s19 = ssub.s32 %s14, 1
      %s20 = ssub.s32 %s14, 2
      %s27 = sadd.s32 1, %s22
      %p28 = scmp.ge.s32.totalorder %s27, 1
      %s29 = scalar_select %p28, 0, %s27
      %s30 = sadd.s32 1, %s21
      %s31 = scalar_select %p28, %s30, %s21
      %p32 = scmp.ge.s32.totalorder %s31, 2
      %s33 = scalar_select %p32, 0, %s31
      %s34 = ssub.s32 %s21, %s33
      %p35 = scmp.eq.s32.totalorder %s34, 0
      %s37 = sadd.s32 %s36, 1
      %s38 = scalar_select %p35, %s36, %s37
      %p41 = pneg %p35
      %p42 = scmp.eq.s32.totalorder %s14, 1
      %p43 = por %p41, %p42
      %p44 = scmp.ne.s32.totalorder %s36, %s39
      %p45 = scmp.eq.s32.totalorder %s14, 0
      %p46 = por %p44, %p45
      %p47 = scmp.ne.s32.totalorder %s36, %s39
      %p48 = scmp.eq.s32.totalorder %s19, 1
      %p49 = por %p47, %p48
      %p50 = scmp.ne.s32.totalorder %s39, %s40
      %p51 = scmp.eq.s32.totalorder %s19, 0
      %p52 = por %p50, %p51
      %p53 = scmp.ne.s32.totalorder %s39, %s40
      %p54 = scmp.eq.s32.totalorder %s20, 1
      %p55 = por %p53, %p54
      %p57 = scmp.ne.s32.totalorder %s40, %s56
      %p58 = scmp.eq.s32.totalorder %s20, 0
      %p59 = por %p57, %p58
      %s60 = ssub.s32 %s21, %s33
      %s61 = ssub.s32 %s22, %s29
      %s62 = sor.u32 %s60, %s61
      %p63 = scmp.eq.s32.totalorder %s62, 0
      %s65 = sadd.s32 %s64, 1
      %s66 = scalar_select %p63, %s64, %s65
      %p69 = pneg %p63
      %p70 = scmp.eq.s32.totalorder %s14, 1
      %p71 = por %p69, %p70
      %p72 = scmp.ne.s32.totalorder %s64, %s67
      %p73 = scmp.eq.s32.totalorder %s14, 0
      %p74 = por %p72, %p73
      %p75 = scmp.ne.s32.totalorder %s64, %s67
      %p76 = scmp.eq.s32.totalorder %s19, 1
      %p77 = por %p75, %p76
      %p78 = scmp.ne.s32.totalorder %s67, %s68
      %p79 = scmp.eq.s32.totalorder %s19, 0
      %p80 = por %p78, %p79
      %p81 = scmp.ne.s32.totalorder %s67, %s68
      %p82 = scmp.eq.s32.totalorder %s20, 1
      %p83 = por %p81, %p82
      %p85 = scmp.ne.s32.totalorder %s68, %s84
      %p86 = scmp.eq.s32.totalorder %s20, 0
      %p87 = por %p85, %p86
      %s88 = ssub.s32 %s21, %s33
      %s89 = ssub.s32 %s22, %s29
      %s90 = sor.u32 %s88, %s89
      %p91 = scmp.eq.s32.totalorder %s90, 0
      %s93 = sadd.s32 %s92, 1
      %s94 = scalar_select %p91, %s92, %s93
      %p97 = pneg %p91
      %p98 = scmp.eq.s32.totalorder %s14, 1
      %p99 = por %p97, %p98
      %p100 = scmp.ne.s32.totalorder %s92, %s95
      %p101 = scmp.eq.s32.totalorder %s14, 0
      %p102 = por %p100, %p101
      %p103 = scmp.ne.s32.totalorder %s92, %s95
      %p104 = scmp.eq.s32.totalorder %s19, 1
      %p105 = por %p103, %p104
      %p106 = scmp.ne.s32.totalorder %s95, %s96
      %p107 = scmp.eq.s32.totalorder %s19, 0
      %p108 = por %p106, %p107
      %p109 = scmp.ne.s32.totalorder %s95, %s96
      %p110 = scmp.eq.s32.totalorder %s20, 1
      %p111 = por %p109, %p110
      %p113 = scmp.ne.s32.totalorder %s96, %s112
      %p114 = scmp.eq.s32.totalorder %s20, 0
      %p115 = por %p113, %p114
      %s117 = sadd.s32 %s116, 1
      %p120 = scmp.eq.s32.totalorder %s14, 1
      %p121 = scmp.ne.s32.totalorder %s116, %s118
      %p122 = scmp.eq.s32.totalorder %s14, 0
      %p123 = por %p121, %p122
      %p124 = scmp.ne.s32.totalorder %s116, %s118
      %p125 = scmp.eq.s32.totalorder %s19, 1
      %p126 = por %p124, %p125
      %p127 = scmp.ne.s32.totalorder %s118, %s119
      %p128 = scmp.eq.s32.totalorder %s19, 0
      %p129 = por %p127, %p128
      %p130 = scmp.ne.s32.totalorder %s118, %s119
      %p131 = scmp.eq.s32.totalorder %s20, 1
      %p132 = por %p130, %p131
      %p134 = scmp.ne.s32.totalorder %s119, %s133
      %p135 = scmp.eq.s32.totalorder %s20, 0
      %p136 = por %p134, %p135
      %s138 = sadd.s32 %s137, 1
      %p141 = scmp.eq.s32.totalorder %s14, 1
      %p142 = scmp.ne.s32.totalorder %s137, %s139
      %p143 = scmp.eq.s32.totalorder %s14, 0
      %p144 = por %p142, %p143
      %p145 = scmp.ne.s32.totalorder %s137, %s139
      %p146 = scmp.eq.s32.totalorder %s19, 1
      %p147 = por %p145, %p146
      %p148 = scmp.ne.s32.totalorder %s139, %s140
      %p149 = scmp.eq.s32.totalorder %s19, 0
      %p150 = por %p148, %p149
      %p151 = scmp.ne.s32.totalorder %s139, %s140
      %p152 = scmp.eq.s32.totalorder %s20, 1
      %p153 = por %p151, %p152
      %p155 = scmp.ne.s32.totalorder %s140, %s154
      %p156 = scmp.eq.s32.totalorder %s20, 0
      %p157 = por %p155, %p156
      %s158 = ssub.s32 %s21, %s33
      %p159 = scmp.eq.s32.totalorder %s158, 0
      %s161 = sadd.s32 %s160, 1
      %s162 = scalar_select %p159, %s160, %s161
      %p165 = pneg %p159
      %p166 = scmp.eq.s32.totalorder %s14, 1
      %p167 = por %p165, %p166
      %p168 = scmp.ne.s32.totalorder %s160, %s163
      %p169 = scmp.eq.s32.totalorder %s14, 0
      %p170 = por %p168, %p169
      %p171 = scmp.ne.s32.totalorder %s160, %s163
      %p172 = scmp.eq.s32.totalorder %s19, 1
      %p173 = por %p171, %p172
      %p174 = scmp.ne.s32.totalorder %s163, %s164
      %p175 = scmp.eq.s32.totalorder %s19, 0
      %p176 = por %p174, %p175
      %p177 = scmp.ne.s32.totalorder %s163, %s164
      %p178 = scmp.eq.s32.totalorder %s20, 1
      %p179 = por %p177, %p178
      %p181 = scmp.ne.s32.totalorder %s164, %s180
      %p182 = scmp.eq.s32.totalorder %s20, 0
      %p183 = por %p181, %p182
      %p184 = scmp.le.s32.totalorder 1, %s14
      %p185 = scmp.lt.s32.totalorder %s14, 3
      %p186 = pnand %p184, %p185
      %p187 = pneg %p186
      // Predicated region
      $region9: #{attention_lora_forward.7} parent=5 // pred_check
        _
      $region10: #{attention_lora_forward.7} parent=5 // pred_check_branch
        %189 = sbr.rel (%p186) target = $region12
      $region11: #{attention_lora_forward.7} parent=5 // pred_region
        %s190 = ssub.s32 %s14, 1
        // Predicated region
        $region13: #{attention_lora_forward.7} parent=11 // pred_check
          %p191 = pneg %p129
        $region14: #{attention_lora_forward.7} parent=11 // pred_check_branch
          %193 = sbr.rel (%p191) target = $region16
        $region15: #{attention_lora_forward.7} parent=11 // pred_region
          _
        $region16: #{attention_lora_forward.7} parent=11 // pred_fallthru
          _
        // Predicated region
        $region17: #{attention_lora_forward.7} parent=11 // pred_check
          %p194 = pneg %p150
        $region18: #{attention_lora_forward.7} parent=11 // pred_check_branch
          %196 = sbr.rel (%p194) target = $region20
        $region19: #{attention_lora_forward.7} parent=11 // pred_region
          _
        $region20: #{attention_lora_forward.7} parent=11 // pred_fallthru
          _
      $region12: #{attention_lora_forward.7} parent=5 // pred_fallthru
        _
      %p197 = scmp.lt.s32.totalorder %s14, 2
      // Predicated region
      $region21: #{attention_lora_forward.7} parent=5 // pred_check
        %p198 = pneg %p197
      $region22: #{attention_lora_forward.7} parent=5 // pred_check_branch
        %200 = sbr.rel (%p198) target = $region24
      $region23: #{attention_lora_forward.7} parent=5 // pred_region
        // Predicated region
        $region25: #{attention_lora_forward.7} parent=23 // pred_check
          %p201 = pneg %p46
        $region26: #{attention_lora_forward.7} parent=23 // pred_check_branch
          %203 = sbr.rel (%p201) target = $region28
        $region27: #{attention_lora_forward.7} parent=23 // pred_region
          %p204 = scmp.lt.s32.totalorder %s21, 1
          %s205 = scalar_select %p204, %s21, 1
          %s206 = smul.addr %s205, 8
          %s207 = scalar_lea.vmem %s0, %s206
        $region28: #{attention_lora_forward.7} parent=23 // pred_fallthru
          _
        // Predicated region
        $region29: #{attention_lora_forward.7} parent=23 // pred_check
          %p208 = pneg %p74
        $region30: #{attention_lora_forward.7} parent=23 // pred_check_branch
          %210 = sbr.rel (%p208) target = $region32
        $region31: #{attention_lora_forward.7} parent=23 // pred_region
          %s211 = smul.u32 16, %s22
          %p212 = scmp.lt.s32.totalorder %s21, 1
          %s213 = scalar_select %p212, %s21, 1
          %p214 = scmp.lt.s32.totalorder %s211, 15
          %s215 = scalar_select %p214, %s211, 15
          %s216 = smul.addr %s213, 16
          %s217 = sadd.s32 %s215, %s216
          %s218 = smul.addr %s217, 8
          %s219 = scalar_lea.vmem %s1, %s218
          %s220 = smul.u32 16, %s22
        $region32: #{attention_lora_forward.7} parent=23 // pred_fallthru
          _
        // Predicated region
        $region33: #{attention_lora_forward.7} parent=23 // pred_check
          %p221 = pneg %p102
        $region34: #{attention_lora_forward.7} parent=23 // pred_check_branch
          %223 = sbr.rel (%p221) target = $region36
        $region35: #{attention_lora_forward.7} parent=23 // pred_region
          %s224 = smul.u32 16, %s22
          %p225 = scmp.lt.s32.totalorder %s21, 1
          %s226 = scalar_select %p225, %s21, 1
          %p227 = scmp.lt.s32.totalorder %s224, 15
          %s228 = scalar_select %p227, %s224, 15
          %s229 = smul.addr %s226, 16
          %s230 = sadd.s32 %s228, %s229
          %s231 = smul.addr %s230, 8
          %s232 = scalar_lea.vmem %s2, %s231
          %s233 = smul.u32 16, %s22
        $region36: #{attention_lora_forward.7} parent=23 // pred_fallthru
          _
      $region24: #{attention_lora_forward.7} parent=5 // pred_fallthru
        _
      %p234 = scmp.le.s32.totalorder 1, %s14
      %p235 = scmp.lt.s32.totalorder %s14, 3
      %p236 = pnand %p234, %p235
      %p237 = pneg %p236
      // Predicated region
      $region37: #{attention_lora_forward.7} parent=5 // pred_check
        _
      $region38: #{attention_lora_forward.7} parent=5 // pred_check_branch
        %239 = sbr.rel (%p236) target = $region40
      $region39: #{attention_lora_forward.7} parent=5 // pred_region
        %s240 = ssub.s32 %s14, 1
        %p241 = scmp.lt.s32.totalorder %s23, 1
        %s242 = scalar_select %p241, %s23, 1
        %s243 = smul.addr %s242, 8
        %s244 = scalar_lea.vmem %s0, %s243
        %p245 = pneg %p52
        %p246 = pneg %p49
        %s247 = smul.u32 16, %s24
        %p248 = scmp.lt.s32.totalorder %s23, 1
        %s249 = scalar_select %p248, %s23, 1
        %p250 = scmp.lt.s32.totalorder %s247, 15
        %s251 = scalar_select %p250, %s247, 15
        %s252 = smul.addr %s249, 16
        %s253 = sadd.s32 %s251, %s252
        %s254 = smul.addr %s253, 8
        %s255 = scalar_lea.vmem %s1, %s254
        %p256 = pneg %p80
        %p257 = pneg %p77
        %s258 = smul.u32 16, %s24
        %p259 = scmp.lt.s32.totalorder %s23, 1
        %s260 = scalar_select %p259, %s23, 1
        %p261 = scmp.lt.s32.totalorder %s258, 15
        %s262 = scalar_select %p261, %s258, 15
        %s263 = smul.addr %s260, 16
        %s264 = sadd.s32 %s262, %s263
        %s265 = smul.addr %s264, 8
        %s266 = scalar_lea.vmem %s2, %s265
        %p267 = pneg %p108
        %p268 = pneg %p105
        %p269 = pneg %p129
        %p270 = pneg %p126
        %p271 = pneg %p150
        %p272 = pneg %p147
        %p273 = pneg %p176
        %p274 = pneg %p173
        %s275 = sand.u32 %s163, 1
        %s276 = scalar_lea.sflag [#allocation6], %s275
        %s277 = sand.u32 %s163, 1
        %s278 = smul.addr %s277, 8
        %s279 = scalar_lea.vmem [#allocation5], %s278
        %p280 = scmp.lt.s32.totalorder %s23, 1
        %s281 = scalar_select %p280, %s23, 1
        %s282 = smul.addr %s281, 8
        %s283 = scalar_lea.vmem %s0, %s282
        %s284 = smul.u32 16, %s24
        %p285 = scmp.lt.s32.totalorder %s23, 1
        %s286 = scalar_select %p285, %s23, 1
        %p287 = scmp.lt.s32.totalorder %s284, 15
        %s288 = scalar_select %p287, %s284, 15
        %s289 = smul.addr %s286, 16
        %s290 = sadd.s32 %s288, %s289
        %s291 = smul.addr %s290, 8
        %s292 = scalar_lea.vmem %s1, %s291
        %s293 = smul.u32 16, %s24
        %s294 = smul.u32 16, %s24
        %p295 = scmp.lt.s32.totalorder %s23, 1
        %s296 = scalar_select %p295, %s23, 1
        %p297 = scmp.lt.s32.totalorder %s294, 15
        %s298 = scalar_select %p297, %s294, 15
        %s299 = smul.addr %s296, 16
        %s300 = sadd.s32 %s298, %s299
        %s301 = smul.addr %s300, 8
        %s302 = scalar_lea.vmem %s2, %s301
        %s303 = smul.u32 16, %s24
        %p304 = scmp.eq.s32.totalorder %s24, 0
        // Predicated region
        $region41: #{attention_lora_forward.7} parent=39 // pred_check
          %p305 = pneg %p304
        $region42: #{attention_lora_forward.7} parent=39 // pred_check_branch
          %307 = sbr.rel (%p305) target = $region44
        $region43: #{attention_lora_forward.7} parent=39 // pred_region
          %vm308 = vcmask 7168
          %309 = vst.msk [vmem:[#allocation2] sm:$0xff] %vm308, -inf
          %310 = vst.msk [vmem:[#allocation2 + $0x8] sm:$0xff] %vm308, -inf
          %311 = vst.msk [vmem:[#allocation3] sm:$0xff] %vm308, 0.0
          %312 = vst.msk [vmem:[#allocation3 + $0x8] sm:$0xff] %vm308, 0.0
          %vm313 = vcmask 130048
          %314 = vst.msk [vmem:[#allocation4] sm:$0xff] %vm313, 0.0
        $region44: #{attention_lora_forward.7} parent=39 // pred_fallthru
          _
        %v315 = vld [vmem:[%s283] sm:$0xff]
        %v316 = vld [vmem:[%s292] sm:$0xff]
        %v317 = vld [vmem:[%s292 + $0x8] sm:$0xff]
        %v318 = vld [vmem:[%s292 + $0x10] sm:$0xff]
        %v319 = vld [vmem:[%s292 + $0x18] sm:$0xff]
        %v320 = vld [vmem:[%s292 + $0x20] sm:$0xff]
        %v321 = vld [vmem:[%s292 + $0x28] sm:$0xff]
        %v322 = vld [vmem:[%s292 + $0x30] sm:$0xff]
        %v323 = vld [vmem:[%s292 + $0x38] sm:$0xff]
        %v324 = vld [vmem:[%s292 + $0x40] sm:$0xff]
        %v325 = vld [vmem:[%s292 + $0x48] sm:$0xff]
        %v326 = vld [vmem:[%s292 + $0x50] sm:$0xff]
        %v327 = vld [vmem:[%s292 + $0x58] sm:$0xff]
        %v328 = vld [vmem:[%s292 + $0x60] sm:$0xff]
        %v329 = vld [vmem:[%s292 + $0x68] sm:$0xff]
        %v330 = vld [vmem:[%s292 + $0x70] sm:$0xff]
        %v331 = vld [vmem:[%s292 + $0x78] sm:$0xff]
        %v332 = vld [vmem:[%s302] sm:$0xff]
        %v333 = vld [vmem:[%s302 + $0x8] sm:$0xff]
        %v334 = vld [vmem:[%s302 + $0x10] sm:$0xff]
        %v335 = vld [vmem:[%s302 + $0x18] sm:$0xff]
        %v336 = vld [vmem:[%s302 + $0x20] sm:$0xff]
        %v337 = vld [vmem:[%s302 + $0x28] sm:$0xff]
        %v338 = vld [vmem:[%s302 + $0x30] sm:$0xff]
        %v339 = vld [vmem:[%s302 + $0x38] sm:$0xff]
        %v340 = vld [vmem:[%s302 + $0x40] sm:$0xff]
        %v341 = vld [vmem:[%s302 + $0x48] sm:$0xff]
        %v342 = vld [vmem:[%s302 + $0x50] sm:$0xff]
        %v343 = vld [vmem:[%s302 + $0x58] sm:$0xff]
        %v344 = vld [vmem:[%s302 + $0x60] sm:$0xff]
        %v345 = vld [vmem:[%s302 + $0x68] sm:$0xff]
        %v346 = vld [vmem:[%s302 + $0x70] sm:$0xff]
        %v347 = vld [vmem:[%s302 + $0x78] sm:$0xff]
        %s348 = smul.u32 %s24, 128
        %v349 = vlaneseq
        %v350 = vand.u32 %v349, 127
        %v351 = vstv %s348
        %v352 = vadd.s32 %v351, %v350
        %vm353 = vcmask 64512
        %v355 = vsel %vm353, %v315, 0
        %v358 = vsel %vm353, %v316, 0
        %v361 = vsel %vm353, %v317, 0
        %v364 = vsel %vm353, %v318, 0
        %v367 = vsel %vm353, %v319, 0
        %v370 = vsel %vm353, %v320, 0
        %v373 = vsel %vm353, %v321, 0
        %v376 = vsel %vm353, %v322, 0
        %v379 = vsel %vm353, %v323, 0
        %v382 = vsel %vm353, %v324, 0
        %v385 = vsel %vm353, %v325, 0
        %v388 = vsel %vm353, %v326, 0
        %v391 = vsel %vm353, %v327, 0
        %v394 = vsel %vm353, %v328, 0
        %v397 = vsel %vm353, %v329, 0
        %v400 = vsel %vm353, %v330, 0
        %v403 = vsel %vm353, %v331, 0
        %405 = vmatprep.subr.mxu0 0.0
        %406 = vmatpush1.xpose.msra.mxu0 %v358
        %407 = vmatprep.subr.mxu0 0.0
        %408 = vmatpush1.xpose.msra.mxu0 %v361
        %409 = vmatprep.subr.mxu0 0.0
        %410 = vmatpush1.xpose.msra.mxu0 %v364
        %411 = vmatprep.subr.mxu0 0.0
        %412 = vmatpush1.xpose.msra.mxu0 %v367
        %413 = vmatprep.subr.mxu0 0.0
        %414 = vmatpush1.xpose.msra.mxu0 %v370
        %415 = vmatprep.subr.mxu0 0.0
        %416 = vmatpush1.xpose.msra.mxu0 %v373
        %417 = vmatprep.subr.mxu0 0.0
        %418 = vmatpush1.xpose.msra.mxu0 %v376
        %419 = vmatprep.subr.mxu0 0.0
        %420 = vmatpush1.xpose.msra.mxu0 %v379
        %421 = vmatprep.subr.mxu0 0.0
        %422 = vmatpush1.xpose.msra.mxu0 %v382
        %423 = vmatprep.subr.mxu0 0.0
        %424 = vmatpush1.xpose.msra.mxu0 %v385
        %425 = vmatprep.subr.mxu0 0.0
        %426 = vmatpush1.xpose.msra.mxu0 %v388
        %427 = vmatprep.subr.mxu0 0.0
        %428 = vmatpush1.xpose.msra.mxu0 %v391
        %429 = vmatprep.subr.mxu0 0.0
        %430 = vmatpush1.xpose.msra.mxu0 %v394
        %431 = vmatprep.subr.mxu0 0.0
        %432 = vmatpush1.xpose.msra.mxu0 %v397
        %433 = vmatprep.subr.mxu0 0.0
        %434 = vmatpush1.xpose.msra.mxu0 %v400
        %435 = vmatprep.subr.mxu0 0.0
        %436 = vmatpush1.xpose.msra.mxu0 %v403
        %437 = vmatprep.subr.mxu0 0.0
        %438 = vmatpush1.xpose.msra.mxu0 0.0
        %439 = vmatprep.subr.mxu0 0.0
        %440 = vmatpush1.xpose.msra.mxu0 0.0
        %441 = vmatprep.subr.mxu0 0.0
        %442 = vmatpush1.xpose.msra.mxu0 0.0
        %443 = vmatprep.subr.mxu0 0.0
        %444 = vmatpush1.xpose.msra.mxu0 0.0
        %445 = vmatprep.subr.mxu0 0.0
        %446 = vmatpush1.xpose.msra.mxu0 0.0
        %447 = vmatprep.subr.mxu0 0.0
        %448 = vmatpush1.xpose.msra.mxu0 0.0
        %449 = vmatprep.subr.mxu0 0.0
        %450 = vmatpush1.xpose.msra.mxu0 0.0
        %451 = vmatprep.subr.mxu0 0.0
        %452 = vmatpush1.xpose.msra.mxu0 0.0
        %453 = vmatprep.subr.mxu0 0.0
        %454 = vmatpush1.xpose.msra.mxu0 0.0
        %455 = vmatprep.subr.mxu0 0.0
        %456 = vmatpush1.xpose.msra.mxu0 0.0
        %457 = vmatprep.subr.mxu0 0.0
        %458 = vmatpush1.xpose.msra.mxu0 0.0
        %459 = vmatprep.subr.mxu0 0.0
        %460 = vmatpush1.xpose.msra.mxu0 0.0
        %461 = vmatprep.subr.mxu0 0.0
        %462 = vmatpush1.xpose.msra.mxu0 0.0
        %463 = vmatprep.subr.mxu0 0.0
        %464 = vmatpush1.xpose.msra.mxu0 0.0
        %465 = vmatprep.subr.mxu0 0.0
        %466 = vmatpush1.xpose.msra.mxu0 0.0
        %467 = vmatprep.subr.mxu0 0.0
        %468 = vmatpush1.xpose.msra.mxu0 0.0
        %469 = vmatprep.mubr.f32.mxu0 0.0
        %470 = vmatmul.mubr.f32.gmra.mrb[0].mxu0 %v355
        %v471 = vpop.f32.mrb[0].mxu0
        %v472 = vadd.f32 0.0, %v471
        %v473 = vpop.f32.mrb[0].mxu0
        %474 = vdwg.mxu0
        %v475 = vmul.f32 %v472, 0.35355338
        %vm476 = vcmp.lt.s32.totalorder %v352, 12
        %v477 = vsel %vm476, %v475, -inf
        %v478 = vld [vmem:[#allocation2] sm:$0xff]
        %479 = vmax.xlane.f32.xlu0 %v477
        %v480 = vpop.xlane.xlu0 %479
        %v481 = vmax.f32 %v478, %v480
        %v482 = vsub.f32 %v478, %v481
        %v483 = vmul.f32 %v482, 1.442695
        %v484 = vpow.pop %v483
        %486 = vset.pattern.permute.xlu0 0
        %487 = vperm.xlu0 %486, %v481
        %v488 = vpop.permute.xlu0 %487
        %v490 = vsub.f32 %v477, %v488
        %v491 = vmul.f32 %v490, 1.442695
        %v492 = vpow.pop %v491
        %v493 = vld [vmem:[#allocation3] sm:$0xff]
        %v494 = vmul.f32 %v484, %v493
        %495 = vadd.xlane.f32.xlu0 %v492
        %v496 = vpop.xlane.xlu0 %495
        %v497 = vadd.f32 %v494, %v496
        %vm498 = vcmask 7168
        %499 = vst.msk [vmem:[#allocation3] sm:$0xff] %vm498, %v497
        %v500 = vld [vmem:[#allocation4] sm:$0xff]
        %502 = vset.pattern.permute.xlu0 0
        %503 = vperm.xlu0 %502, %v484
        %v504 = vpop.permute.xlu0 %503
        %v506 = vmul.f32 %v504, %v500
        %507 = vmatprep.subr.mxu0 0.0
        %508 = vmatpush1.msra.mxu0 %v332
        %509 = vmatprep.subr.mxu0 0.0
        %510 = vmatpush1.msra.mxu0 %v333
        %511 = vmatprep.subr.mxu0 0.0
        %512 = vmatpush1.msra.mxu0 %v334
        %513 = vmatprep.subr.mxu0 0.0
        %514 = vmatpush1.msra.mxu0 %v335
        %515 = vmatprep.subr.mxu0 0.0
        %516 = vmatpush1.msra.mxu0 %v336
        %517 = vmatprep.subr.mxu0 0.0
        %518 = vmatpush1.msra.mxu0 %v337
        %519 = vmatprep.subr.mxu0 0.0
        %520 = vmatpush1.msra.mxu0 %v338
        %521 = vmatprep.subr.mxu0 0.0
        %522 = vmatpush1.msra.mxu0 %v339
        %523 = vmatprep.subr.mxu0 0.0
        %524 = vmatpush1.msra.mxu0 %v340
        %525 = vmatprep.subr.mxu0 0.0
        %526 = vmatpush1.msra.mxu0 %v341
        %527 = vmatprep.subr.mxu0 0.0
        %528 = vmatpush1.msra.mxu0 %v342
        %529 = vmatprep.subr.mxu0 0.0
        %530 = vmatpush1.msra.mxu0 %v343
        %531 = vmatprep.subr.mxu0 0.0
        %532 = vmatpush1.msra.mxu0 %v344
        %533 = vmatprep.subr.mxu0 0.0
        %534 = vmatpush1.msra.mxu0 %v345
        %535 = vmatprep.subr.mxu0 0.0
        %536 = vmatpush1.msra.mxu0 %v346
        %537 = vmatprep.subr.mxu0 0.0
        %538 = vmatpush1.msra.mxu0 %v347
        %539 = vmatprep.subr.mxu0 0.0
        %540 = vmatpush1.msra.mxu0 0.0
        %541 = vmatprep.subr.mxu0 0.0
        %542 = vmatpush1.msra.mxu0 0.0
        %543 = vmatprep.subr.mxu0 0.0
        %544 = vmatpush1.msra.mxu0 0.0
        %545 = vmatprep.subr.mxu0 0.0
        %546 = vmatpush1.msra.mxu0 0.0
        %547 = vmatprep.subr.mxu0 0.0
        %548 = vmatpush1.msra.mxu0 0.0
        %549 = vmatprep.subr.mxu0 0.0
        %550 = vmatpush1.msra.mxu0 0.0
        %551 = vmatprep.subr.mxu0 0.0
        %552 = vmatpush1.msra.mxu0 0.0
        %553 = vmatprep.subr.mxu0 0.0
        %554 = vmatpush1.msra.mxu0 0.0
        %555 = vmatprep.subr.mxu0 0.0
        %556 = vmatpush1.msra.mxu0 0.0
        %557 = vmatprep.subr.mxu0 0.0
        %558 = vmatpush1.msra.mxu0 0.0
        %559 = vmatprep.subr.mxu0 0.0
        %560 = vmatpush1.msra.mxu0 0.0
        %561 = vmatprep.subr.mxu0 0.0
        %562 = vmatpush1.msra.mxu0 0.0
        %563 = vmatprep.subr.mxu0 0.0
        %564 = vmatpush1.msra.mxu0 0.0
        %565 = vmatprep.subr.mxu0 0.0
        %566 = vmatpush1.msra.mxu0 0.0
        %567 = vmatprep.subr.mxu0 0.0
        %568 = vmatpush1.msra.mxu0 0.0
        %569 = vmatprep.subr.mxu0 0.0
        %570 = vmatpush1.msra.mxu0 0.0
        %571 = vmatprep.mubr.f32.mxu0 0.0
        %572 = vmatmul.mubr.f32.gmra.mrb[0].mxu0 %v492
        %v573 = vpop.f32.mrb[0].mxu0
        %v574 = vadd.f32 0.0, %v573
        %v575 = vpop.f32.mrb[0].mxu0
        %576 = vdwg.mxu0
        %v577 = vadd.f32 %v506, %v574
        %578 = vst.msk [vmem:[#allocation4] sm:$0xff] %vm353, %v577
        %579 = vst.msk [vmem:[#allocation2] sm:$0xff] %vm498, %v481
        %580 = vrot.lane.b32.xlu0 %v315, 120
        %v581 = vpop.permute.xlu0 %580
        %582 = vrot.lane.b32.xlu0 %v316, 120
        %v583 = vpop.permute.xlu0 %582
        %584 = vrot.lane.b32.xlu0 %v317, 120
        %v585 = vpop.permute.xlu0 %584
        %586 = vrot.lane.b32.xlu0 %v318, 120
        %v587 = vpop.permute.xlu0 %586
        %588 = vrot.lane.b32.xlu0 %v319, 120
        %v589 = vpop.permute.xlu0 %588
        %590 = vrot.lane.b32.xlu0 %v320, 120
        %v591 = vpop.permute.xlu0 %590
        %592 = vrot.lane.b32.xlu0 %v321, 120
        %v593 = vpop.permute.xlu0 %592
        %594 = vrot.lane.b32.xlu0 %v322, 120
        %v595 = vpop.permute.xlu0 %594
        %596 = vrot.lane.b32.xlu0 %v323, 120
        %v597 = vpop.permute.xlu0 %596
        %598 = vrot.lane.b32.xlu0 %v324, 120
        %v599 = vpop.permute.xlu0 %598
        %600 = vrot.lane.b32.xlu0 %v325, 120
        %v601 = vpop.permute.xlu0 %600
        %602 = vrot.lane.b32.xlu0 %v326, 120
        %v603 = vpop.permute.xlu0 %602
        %604 = vrot.lane.b32.xlu0 %v327, 120
        %v605 = vpop.permute.xlu0 %604
        %606 = vrot.lane.b32.xlu0 %v328, 120
        %v607 = vpop.permute.xlu0 %606
        %608 = vrot.lane.b32.xlu0 %v329, 120
        %v609 = vpop.permute.xlu0 %608
        %610 = vrot.lane.b32.xlu0 %v330, 120
        %v611 = vpop.permute.xlu0 %610
        %612 = vrot.lane.b32.xlu0 %v331, 120
        %v613 = vpop.permute.xlu0 %612
        %v614 = vsel %vm353, %v581, 0
        %v616 = vsel %vm353, %v583, 0
        %v618 = vsel %vm353, %v585, 0
        %v620 = vsel %vm353, %v587, 0
        %v622 = vsel %vm353, %v589, 0
        %v624 = vsel %vm353, %v591, 0
        %v626 = vsel %vm353, %v593, 0
        %v628 = vsel %vm353, %v595, 0
        %v630 = vsel %vm353, %v597, 0
        %v632 = vsel %vm353, %v599, 0
        %v634 = vsel %vm353, %v601, 0
        %v636 = vsel %vm353, %v603, 0
        %v638 = vsel %vm353, %v605, 0
        %v640 = vsel %vm353, %v607, 0
        %v642 = vsel %vm353, %v609, 0
        %v644 = vsel %vm353, %v611, 0
        %v646 = vsel %vm353, %v613, 0
        %648 = vmatprep.subr.mxu0 0.0
        %649 = vmatpush1.xpose.msra.mxu0 %v616
        %650 = vmatprep.subr.mxu0 0.0
        %651 = vmatpush1.xpose.msra.mxu0 %v618
        %652 = vmatprep.subr.mxu0 0.0
        %653 = vmatpush1.xpose.msra.mxu0 %v620
        %654 = vmatprep.subr.mxu0 0.0
        %655 = vmatpush1.xpose.msra.mxu0 %v622
        %656 = vmatprep.subr.mxu0 0.0
        %657 = vmatpush1.xpose.msra.mxu0 %v624
        %658 = vmatprep.subr.mxu0 0.0
        %659 = vmatpush1.xpose.msra.mxu0 %v626
        %660 = vmatprep.subr.mxu0 0.0
        %661 = vmatpush1.xpose.msra.mxu0 %v628
        %662 = vmatprep.subr.mxu0 0.0
        %663 = vmatpush1.xpose.msra.mxu0 %v630
        %664 = vmatprep.subr.mxu0 0.0
        %665 = vmatpush1.xpose.msra.mxu0 %v632
        %666 = vmatprep.subr.mxu0 0.0
        %667 = vmatpush1.xpose.msra.mxu0 %v634
        %668 = vmatprep.subr.mxu0 0.0
        %669 = vmatpush1.xpose.msra.mxu0 %v636
        %670 = vmatprep.subr.mxu0 0.0
        %671 = vmatpush1.xpose.msra.mxu0 %v638
        %672 = vmatprep.subr.mxu0 0.0
        %673 = vmatpush1.xpose.msra.mxu0 %v640
        %674 = vmatprep.subr.mxu0 0.0
        %675 = vmatpush1.xpose.msra.mxu0 %v642
        %676 = vmatprep.subr.mxu0 0.0
        %677 = vmatpush1.xpose.msra.mxu0 %v644
        %678 = vmatprep.subr.mxu0 0.0
        %679 = vmatpush1.xpose.msra.mxu0 %v646
        %680 = vmatprep.subr.mxu0 0.0
        %681 = vmatpush1.xpose.msra.mxu0 0.0
        %682 = vmatprep.subr.mxu0 0.0
        %683 = vmatpush1.xpose.msra.mxu0 0.0
        %684 = vmatprep.subr.mxu0 0.0
        %685 = vmatpush1.xpose.msra.mxu0 0.0
        %686 = vmatprep.subr.mxu0 0.0
        %687 = vmatpush1.xpose.msra.mxu0 0.0
        %688 = vmatprep.subr.mxu0 0.0
        %689 = vmatpush1.xpose.msra.mxu0 0.0
        %690 = vmatprep.subr.mxu0 0.0
        %691 = vmatpush1.xpose.msra.mxu0 0.0
        %692 = vmatprep.subr.mxu0 0.0
        %693 = vmatpush1.xpose.msra.mxu0 0.0
        %694 = vmatprep.subr.mxu0 0.0
        %695 = vmatpush1.xpose.msra.mxu0 0.0
        %696 = vmatprep.subr.mxu0 0.0
        %697 = vmatpush1.xpose.msra.mxu0 0.0
        %698 = vmatprep.subr.mxu0 0.0
        %699 = vmatpush1.xpose.msra.mxu0 0.0
        %700 = vmatprep.subr.mxu0 0.0
        %701 = vmatpush1.xpose.msra.mxu0 0.0
        %702 = vmatprep.subr.mxu0 0.0
        %703 = vmatpush1.xpose.msra.mxu0 0.0
        %704 = vmatprep.subr.mxu0 0.0
        %705 = vmatpush1.xpose.msra.mxu0 0.0
        %706 = vmatprep.subr.mxu0 0.0
        %707 = vmatpush1.xpose.msra.mxu0 0.0
        %708 = vmatprep.subr.mxu0 0.0
        %709 = vmatpush1.xpose.msra.mxu0 0.0
        %710 = vmatprep.subr.mxu0 0.0
        %711 = vmatpush1.xpose.msra.mxu0 0.0
        %712 = vmatprep.mubr.f32.mxu0 0.0
        %713 = vmatmul.mubr.f32.gmra.mrb[0].mxu0 %v614
        %v714 = vpop.f32.mrb[0].mxu0
        %v715 = vadd.f32 0.0, %v714
        %v716 = vpop.f32.mrb[0].mxu0
        %717 = vdwg.mxu0
        %v718 = vmul.f32 %v715, 0.35355338
        %v719 = vsel %vm476, %v718, -inf
        %s720 = scalar_lea.vmem [#allocation2], 8
        %v721 = vld [vmem:[%s720] sm:$0xff]
        %722 = vmax.xlane.f32.xlu0 %v719
        %v723 = vpop.xlane.xlu0 %722
        %v724 = vmax.f32 %v721, %v723
        %v725 = vsub.f32 %v721, %v724
        %v726 = vmul.f32 %v725, 1.442695
        %v727 = vpow.pop %v726
        %729 = vset.pattern.permute.xlu0 0
        %730 = vperm.xlu0 %729, %v724
        %v731 = vpop.permute.xlu0 %730
        %v733 = vsub.f32 %v719, %v731
        %v734 = vmul.f32 %v733, 1.442695
        %v735 = vpow.pop %v734
        %s736 = scalar_lea.vmem [#allocation3], 8
        %v737 = vld [vmem:[%s736] sm:$0xff]
        %v738 = vmul.f32 %v727, %v737
        %739 = vadd.xlane.f32.xlu0 %v735
        %v740 = vpop.xlane.xlu0 %739
        %v741 = vadd.f32 %v738, %v740
        %742 = vst.msk [vmem:[%s736] sm:$0xff] %vm498, %v741
        %v743 = vld [vmem:[#allocation4] sm:$0xff]
        %745 = vset.pattern.permute.xlu0 0
        %746 = vperm.xlu0 %745, %v727
        %v747 = vpop.permute.xlu0 %746
        %v749 = vmul.f32 %v747, %v743
        %766 = vrot.lane.b32.xlu0 %v332, 120
        %v767 = vpop.permute.xlu0 %766
        %768 = vrot.lane.b32.xlu0 %v333, 120
        %v769 = vpop.permute.xlu0 %768
        %770 = vrot.lane.b32.xlu0 %v334, 120
        %v771 = vpop.permute.xlu0 %770
        %772 = vrot.lane.b32.xlu0 %v335, 120
        %v773 = vpop.permute.xlu0 %772
        %774 = vrot.lane.b32.xlu0 %v336, 120
        %v775 = vpop.permute.xlu0 %774
        %776 = vrot.lane.b32.xlu0 %v337, 120
        %v777 = vpop.permute.xlu0 %776
        %778 = vrot.lane.b32.xlu0 %v338, 120
        %v779 = vpop.permute.xlu0 %778
        %780 = vrot.lane.b32.xlu0 %v339, 120
        %v781 = vpop.permute.xlu0 %780
        %782 = vrot.lane.b32.xlu0 %v340, 120
        %v783 = vpop.permute.xlu0 %782
        %784 = vrot.lane.b32.xlu0 %v341, 120
        %v785 = vpop.permute.xlu0 %784
        %786 = vrot.lane.b32.xlu0 %v342, 120
        %v787 = vpop.permute.xlu0 %786
        %788 = vrot.lane.b32.xlu0 %v343, 120
        %v789 = vpop.permute.xlu0 %788
        %790 = vrot.lane.b32.xlu0 %v344, 120
        %v791 = vpop.permute.xlu0 %790
        %792 = vrot.lane.b32.xlu0 %v345, 120
        %v793 = vpop.permute.xlu0 %792
        %794 = vrot.lane.b32.xlu0 %v346, 120
        %v795 = vpop.permute.xlu0 %794
        %796 = vrot.lane.b32.xlu0 %v347, 120
        %v797 = vpop.permute.xlu0 %796
        %814 = vmatprep.subr.mxu0 0.0
        %815 = vmatpush1.msra.mxu0 %v767
        %816 = vmatprep.subr.mxu0 0.0
        %817 = vmatpush1.msra.mxu0 %v769
        %818 = vmatprep.subr.mxu0 0.0
        %819 = vmatpush1.msra.mxu0 %v771
        %820 = vmatprep.subr.mxu0 0.0
        %821 = vmatpush1.msra.mxu0 %v773
        %822 = vmatprep.subr.mxu0 0.0
        %823 = vmatpush1.msra.mxu0 %v775
        %824 = vmatprep.subr.mxu0 0.0
        %825 = vmatpush1.msra.mxu0 %v777
        %826 = vmatprep.subr.mxu0 0.0
        %827 = vmatpush1.msra.mxu0 %v779
        %828 = vmatprep.subr.mxu0 0.0
        %829 = vmatpush1.msra.mxu0 %v781
        %830 = vmatprep.subr.mxu0 0.0
        %831 = vmatpush1.msra.mxu0 %v783
        %832 = vmatprep.subr.mxu0 0.0
        %833 = vmatpush1.msra.mxu0 %v785
        %834 = vmatprep.subr.mxu0 0.0
        %835 = vmatpush1.msra.mxu0 %v787
        %836 = vmatprep.subr.mxu0 0.0
        %837 = vmatpush1.msra.mxu0 %v789
        %838 = vmatprep.subr.mxu0 0.0
        %839 = vmatpush1.msra.mxu0 %v791
        %840 = vmatprep.subr.mxu0 0.0
        %841 = vmatpush1.msra.mxu0 %v793
        %842 = vmatprep.subr.mxu0 0.0
        %843 = vmatpush1.msra.mxu0 %v795
        %844 = vmatprep.subr.mxu0 0.0
        %845 = vmatpush1.msra.mxu0 %v797
        %846 = vmatprep.subr.mxu0 0.0
        %847 = vmatpush1.msra.mxu0 0.0
        %848 = vmatprep.subr.mxu0 0.0
        %849 = vmatpush1.msra.mxu0 0.0
        %850 = vmatprep.subr.mxu0 0.0
        %851 = vmatpush1.msra.mxu0 0.0
        %852 = vmatprep.subr.mxu0 0.0
        %853 = vmatpush1.msra.mxu0 0.0
        %854 = vmatprep.subr.mxu0 0.0
        %855 = vmatpush1.msra.mxu0 0.0
        %856 = vmatprep.subr.mxu0 0.0
        %857 = vmatpush1.msra.mxu0 0.0
        %858 = vmatprep.subr.mxu0 0.0
        %859 = vmatpush1.msra.mxu0 0.0
        %860 = vmatprep.subr.mxu0 0.0
        %861 = vmatpush1.msra.mxu0 0.0
        %862 = vmatprep.subr.mxu0 0.0
        %863 = vmatpush1.msra.mxu0 0.0
        %864 = vmatprep.subr.mxu0 0.0
        %865 = vmatpush1.msra.mxu0 0.0
        %866 = vmatprep.subr.mxu0 0.0
        %867 = vmatpush1.msra.mxu0 0.0
        %868 = vmatprep.subr.mxu0 0.0
        %869 = vmatpush1.msra.mxu0 0.0
        %870 = vmatprep.subr.mxu0 0.0
        %871 = vmatpush1.msra.mxu0 0.0
        %872 = vmatprep.subr.mxu0 0.0
        %873 = vmatpush1.msra.mxu0 0.0
        %874 = vmatprep.subr.mxu0 0.0
        %875 = vmatpush1.msra.mxu0 0.0
        %876 = vmatprep.subr.mxu0 0.0
        %877 = vmatpush1.msra.mxu0 0.0
        %878 = vmatprep.mubr.f32.mxu0 0.0
        %879 = vmatmul.mubr.f32.gmra.mrb[0].mxu0 %v735
        %v880 = vpop.f32.mrb[0].mxu0
        %v881 = vadd.f32 0.0, %v880
        %v882 = vpop.f32.mrb[0].mxu0
        %883 = vdwg.mxu0
        %885 = vrot.lane.b32.xlu0 %v881, 8
        %v886 = vpop.permute.xlu0 %885
        %v888 = vadd.f32 %v749, %v886
        %vm889 = vcmask 130112
        %890 = vst.msk [vmem:[#allocation4] sm:$0xff] %vm889, %v888
        %891 = vst.msk [vmem:[%s720] sm:$0xff] %vm498, %v724
        // Predicated region
        $region45: #{attention_lora_forward.7} parent=39 // pred_check
          %p892 = pneg %p304
        $region46: #{attention_lora_forward.7} parent=39 // pred_check_branch
          %894 = sbr.rel (%p892) target = $region48
        $region47: #{attention_lora_forward.7} parent=39 // pred_region
          %v895 = vld [vmem:[#allocation3] sm:$0xff]
          %v896 = vrcp.pop %v895
          %v897 = vld [vmem:[#allocation4] sm:$0xff]
          %899 = vset.pattern.permute.xlu0 0
          %900 = vperm.xlu0 %899, %v896
          %v901 = vpop.permute.xlu0 %900
          %v903 = vmul.f32 %v897, %v901
          %904 = vst.msk [vmem:[#allocation4] sm:$0xff] %vm353, %v903
          %v905 = vld [vmem:[%s736] sm:$0xff]
          %v906 = vrcp.pop %v905
          %v907 = vld [vmem:[#allocation4] sm:$0xff]
          %909 = vset.pattern.permute.xlu0 0
          %910 = vperm.xlu0 %909, %v906
          %v911 = vpop.permute.xlu0 %910
          %v913 = vmul.f32 %v907, %v911
          %914 = vst.msk [vmem:[#allocation4] sm:$0xff] %vm889, %v913
          %v915 = vld [vmem:[#allocation4] sm:$0xff]
          %v916 = vld [vmem:[%s3] sm:$0xff]
          %v917 = vld [vmem:[%s3 + $0x8] sm:$0xff]
          %v918 = vld [vmem:[%s4] sm:$0x1]
          %v920 = vlaneseq
          %v921 = vshrl.u32 %v920, 7
          %v922 = vsub.s32 0, %v921
          %v923 = vrot.slane %v918, %v922
          %vm925 = vcmask 130048
          %v927 = vsel %vm925, %v915, 0
          %929 = vmatprep.subr.mxu0 0.0
          %930 = vmatpush1.msra.mxu0 %v916
          %931 = vmatprep.subr.mxu0 0.0
          %932 = vmatpush1.msra.mxu0 %v917
          %933 = vmatprep.subr.mxu0 0.0
          %934 = vmatpush1.msra.mxu0 0.0
          %935 = vmatprep.subr.mxu0 0.0
          %936 = vmatpush1.msra.mxu0 0.0
          %937 = vmatprep.subr.mxu0 0.0
          %938 = vmatpush1.msra.mxu0 0.0
          %939 = vmatprep.subr.mxu0 0.0
          %940 = vmatpush1.msra.mxu0 0.0
          %941 = vmatprep.subr.mxu0 0.0
          %942 = vmatpush1.msra.mxu0 0.0
          %943 = vmatprep.subr.mxu0 0.0
          %944 = vmatpush1.msra.mxu0 0.0
          %945 = vmatprep.subr.mxu0 0.0
          %946 = vmatpush1.msra.mxu0 0.0
          %947 = vmatprep.subr.mxu0 0.0
          %948 = vmatpush1.msra.mxu0 0.0
          %949 = vmatprep.subr.mxu0 0.0
          %950 = vmatpush1.msra.mxu0 0.0
          %951 = vmatprep.subr.mxu0 0.0
          %952 = vmatpush1.msra.mxu0 0.0
          %953 = vmatprep.subr.mxu0 0.0
          %954 = vmatpush1.msra.mxu0 0.0
          %955 = vmatprep.subr.mxu0 0.0
          %956 = vmatpush1.msra.mxu0 0.0
          %957 = vmatprep.subr.mxu0 0.0
          %958 = vmatpush1.msra.mxu0 0.0
          %959 = vmatprep.subr.mxu0 0.0
          %960 = vmatpush1.msra.mxu0 0.0
          %961 = vmatprep.subr.mxu0 0.0
          %962 = vmatpush1.msra.mxu0 0.0
          %963 = vmatprep.subr.mxu0 0.0
          %964 = vmatpush1.msra.mxu0 0.0
          %965 = vmatprep.subr.mxu0 0.0
          %966 = vmatpush1.msra.mxu0 0.0
          %967 = vmatprep.subr.mxu0 0.0
          %968 = vmatpush1.msra.mxu0 0.0
          %969 = vmatprep.subr.mxu0 0.0
          %970 = vmatpush1.msra.mxu0 0.0
          %971 = vmatprep.subr.mxu0 0.0
          %972 = vmatpush1.msra.mxu0 0.0
          %973 = vmatprep.subr.mxu0 0.0
          %974 = vmatpush1.msra.mxu0 0.0
          %975 = vmatprep.subr.mxu0 0.0
          %976 = vmatpush1.msra.mxu0 0.0
          %977 = vmatprep.subr.mxu0 0.0
          %978 = vmatpush1.msra.mxu0 0.0
          %979 = vmatprep.subr.mxu0 0.0
          %980 = vmatpush1.msra.mxu0 0.0
          %981 = vmatprep.subr.mxu0 0.0
          %982 = vmatpush1.msra.mxu0 0.0
          %983 = vmatprep.subr.mxu0 0.0
          %984 = vmatpush1.msra.mxu0 0.0
          %985 = vmatprep.subr.mxu0 0.0
          %986 = vmatpush1.msra.mxu0 0.0
          %987 = vmatprep.subr.mxu0 0.0
          %988 = vmatpush1.msra.mxu0 0.0
          %989 = vmatprep.subr.mxu0 0.0
          %990 = vmatpush1.msra.mxu0 0.0
          %991 = vmatprep.subr.mxu0 0.0
          %992 = vmatpush1.msra.mxu0 0.0
          %993 = vmatprep.mubr.f32.mxu0 0.0
          %994 = vmatmul.mubr.f32.gmra.mrb[0].mxu0 %v927
          %v995 = vpop.f32.mrb[0].mxu0
          %v996 = vadd.f32 %v923, %v995
          %v997 = vpop.f32.mrb[0].mxu0
          %998 = vdwg.mxu0
          %vm999 = vcmask 261120
          %1000 = vst.msk [vmem:[%s279] sm:$0xff] %vm999, %v996
        $region48: #{attention_lora_forward.7} parent=39 // pred_fallthru
          _
        %s1001 = sand.u32 %s163, 1
        %s1002 = scalar_lea.sflag [#allocation6], %s1001
        %s1003 = sand.u32 %s163, 1
        %s1004 = smul.addr %s1003, 8
        %s1005 = scalar_lea.vmem [#allocation5], %s1004
        // Predicated region
        $region49: #{attention_lora_forward.7} parent=39 // pred_check
          %p1006 = pneg %p173
        $region50: #{attention_lora_forward.7} parent=39 // pred_check_branch
          %1008 = sbr.rel (%p1006) target = $region52
        $region51: #{attention_lora_forward.7} parent=39 // pred_region
          %s1010 = ssub.s32 128, 128
          %1011 = vsyncadd %s1002, %s1010
          %s1012 = smul.addr %s23, 128
          %s1013 = scalar_lea.hbm %s5, %s1012
          %s1015 = sshll.u32 %s1005, 4
          %s1016 = int_to_ptr.vmem [resolvable:$true] %s1015
          %1018 = dma.vmem_to_hbm [thread:$0]  %s1016, 128, %s1013, %s1002
        $region52: #{attention_lora_forward.7} parent=39 // pred_fallthru
          _
      $region40: #{attention_lora_forward.7} parent=5 // pred_fallthru
        _
      %p1019 = scmp.le.s32.totalorder 2, %s14
      // Predicated region
      $region53: #{attention_lora_forward.7} parent=5 // pred_check
        %p1020 = pneg %p1019
      $region54: #{attention_lora_forward.7} parent=5 // pred_check_branch
        %1022 = sbr.rel (%p1020) target = $region56
      $region55: #{attention_lora_forward.7} parent=5 // pred_region
        %s1023 = ssub.s32 %s14, 2
        // Predicated region
        $region57: #{attention_lora_forward.7} parent=55 // pred_check
          %p1024 = pneg %p179
        $region58: #{attention_lora_forward.7} parent=55 // pred_check_branch
          %1026 = sbr.rel (%p1024) target = $region60
        $region59: #{attention_lora_forward.7} parent=55 // pred_region
          %s1027 = sand.u32 %s164, 1
          %s1028 = scalar_lea.sflag [#allocation6], %s1027
          %s1029 = sand.u32 %s164, 1
          %s1030 = smul.addr %s1029, 8
          %s1031 = scalar_lea.vmem [#allocation5], %s1030
          %1032 = dma.done %s1028, 128
        $region60: #{attention_lora_forward.7} parent=55 // pred_fallthru
          _
      $region56: #{attention_lora_forward.7} parent=5 // pred_fallthru
        _
    $region6: #{attention_lora_forward.7} parent=1 // loop_footer
      %s18 = sadd.s32 1, %s14
    $region7: #{attention_lora_forward.7} parent=1 // loop_footer_branch
      %13 = sbr.rel target = $region3
    $region8: #{attention_lora_forward.7} parent=1 // loop_exit
      _
    %1033 = vsyncpa [#allocation6], 1
    %s1034 = scalar_lea.sflag [#allocation6], 1
    %1035 = vsyncpa %s1034, 1

</llo_original>
